<compile_context>
chip_gen: v5e
topology: v5e:2x2
jax: 0.10.0
libtpu: 0.0.40
codegen_flags: <defaults>
</compile_context>

<pallas_src>
import functools

import jax
import jax.numpy as jnp
from jax.experimental import pallas as pl
from jax.experimental.pallas import tpu as pltpu


def _round_up(x, m):
    return ((x + m - 1) // m) * m


# ---------------------------------------------------------------------------
# Kernel: one grid step == one batch tile of TB samples.
# ---------------------------------------------------------------------------
def _self_attention_kernel(u_ref, wqkv_ref, bqkv_ref, out_ref, *,
                           field_idx, n_fields, n_field_info):
    f32 = jnp.float32
    u = u_ref[...]                                   # (TB, S, F)
    TB, S, Fd = u.shape
    E = n_field_info

    # ---- fused Q|K|V projection: one (TB*S, F) x (F, 3E) matmul -----------
    u2 = u.reshape(TB * S, Fd)                       # (M, F)
    qkv = jnp.dot(u2, wqkv_ref[...],
                  preferred_element_type=f32) + bqkv_ref[...]      # (M, 3E)
    q = qkv[:, 0 * E:1 * E].reshape(TB, S, E)
    k = qkv[:, 1 * E:2 * E].reshape(TB, S, E)
    v = qkv[:, 2 * E:3 * E].reshape(TB, S, E)

    # ---- scaled dot-product attention (batched over TB) -------------------
    scale = 1.0 / (n_fields ** 0.5)
    scores = jnp.einsum('bse,bte->bst', q, k,
                        preferred_element_type=f32) * scale        # (TB, S, S)
    m = jnp.max(scores, axis=-1, keepdims=True)
    p = jnp.exp(scores - m)                          # unnormalized weights
    rowsum = jnp.sum(p, axis=-1)                     # (TB, S)
    # TODO(synk): attention dropout omitted (eval / inference mode => identity).
    ufv = jnp.einsum('bst,bte->bse', p, v,
                     preferred_element_type=f32)                   # (TB, S, E)

    # ---- deferred softmax norm fused with the mean over E -----------------
    # mean_e((p/rowsum) @ V) == sum_e(p @ V) / (rowsum * E)
    output = jnp.sum(ufv, axis=2) * pl.reciprocal(rowsum * float(E),
                                                  approx=False)    # (TB, S)

    # ---- residual / self-feature ------------------------------------------
    if field_idx > 0:                                # static python branch
        add = u[:, :, field_idx]                     # (TB, S)
    else:
        add = jnp.mean(u, axis=2)                    # (TB, S)
    out_ref[...] = (output + add).astype(out_ref.dtype)


# ---------------------------------------------------------------------------
# Wrapper
# ---------------------------------------------------------------------------
def pack_qkv_params(params):
    """Pack separate q/k/v Linear params into one fused weight/bias (done once)."""
    wqkv = jnp.concatenate([params['wq'], params['wk'], params['wv']], axis=1)  # (F, 3E)
    bqkv = jnp.concatenate([params['bq'], params['bk'], params['bv']], axis=1)  # (1, 3E)
    return wqkv, bqkv


def self_attention_forward(U, wqkv, bqkv, field_idx, *, block_b=128):
    """U: (B, S, F) f32. wqkv: (F, 3E). bqkv: (1, 3E). field_idx: static int.
    Returns (B, S) f32."""
    B, S, Fd = U.shape
    E = wqkv.shape[1] // 3

    # Batch tile: multiple of 8 (sublane rule on the (TB, S) output block),
    # capped at block_b so the per-step working set stays small and the grid
    # has >= 2 steps once B is large (pipelining + v7x dual-core sharding).
    TB = min(block_b, _round_up(B, 8))
    n_tiles = pl.cdiv(B, TB)
    B_pad = n_tiles * TB
    if B_pad != B:                                   # pad, never drop, samples
        U = jnp.pad(U, ((0, B_pad - B), (0, 0), (0, 0)))

    kernel = functools.partial(_self_attention_kernel,
                               field_idx=int(field_idx),
                               n_fields=Fd, n_field_info=E)

    resident = lambda shape: pl.BlockSpec(shape, lambda b: (0, 0))  # weights stay in VMEM

    out = pl.pallas_call(
        kernel,
        out_shape=jax.ShapeDtypeStruct((B_pad, S), jnp.float32),
        grid=(n_tiles,),
        in_specs=[
            pl.BlockSpec((TB, S, Fd), lambda b: (b, 0, 0)),   # U (pipelined over batch)
            resident((Fd, 3 * E)),                            # fused W_qkv
            resident((1, 3 * E)),                             # fused b_qkv
        ],
        out_specs=pl.BlockSpec((TB, S), lambda b: (b, 0)),
        compiler_params=pltpu.CompilerParams(
            dimension_semantics=("parallel",),
            vmem_limit_bytes=32 * 1024 * 1024),
    )(U, wqkv, bqkv)
    return out[:B]


# ---------------------------------------------------------------------------
# Pure-JAX reference (mirrors the PyTorch forward in eval mode)
# ---------------------------------------------------------------------------
def self_attention_ref(U, params, field_idx):
    q = U @ params['wq'] + params['bq']
    k = U @ params['wk'] + params['bk']
    v = U @ params['wv'] + params['bv']
    scores = jnp.einsum('bse,bte->bst', q, k) / (U.shape[-1] ** 0.5)
    w = jax.nn.softmax(scores, axis=-1)
    ufv = jnp.einsum('bst,bte->bse', w, v)
    out = ufv.mean(axis=2)
    if field_idx > 0:
        out = out + U[:, :, field_idx]
    else:
        out = out + U.mean(axis=2)
    return out


if __name__ == "__main__":
    B = 2
    n_field_info = 32     # also the "sequence" length of U in this module
    n_fields = 4

    key = jax.random.PRNGKey(0)

    def make_linear(key, fan_in, fan_out):
        # nn.Linear(fan_in, fan_out): W stored pre-transposed as (fan_in, fan_out).
        key, kw, kb = jax.random.split(key, 3)
        bound = 1.0 / jnp.sqrt(fan_in)
        w = jax.random.uniform(kw, (fan_in, fan_out), jnp.float32, -bound, bound)
        b = jax.random.uniform(kb, (1, fan_out), jnp.float32, -bound, bound)
        return (w, b), key

    (wq, bq), key = make_linear(key, n_fields, n_field_info)
    (wk, bk), key = make_linear(key, n_fields, n_field_info)
    (wv, bv), key = make_linear(key, n_fields, n_field_info)
    params = dict(wq=wq, bq=bq, wk=wk, bk=bk, wv=wv, bv=bv)
    # NOTE: self.mlp / self.norm / self.norm2 are constructed by the module but
    # never used inside forward(), so they are intentionally not instantiated.

    wqkv, bqkv = pack_qkv_params(params)     # one-time wrapper-side packing

    key, ku = jax.random.split(key)
    U = jax.random.normal(ku, (B, n_field_info, n_fields), jnp.float32)

    for field_idx in (0, 2):                 # residual path and self-feature path
        out = self_attention_forward(U, wqkv, bqkv, field_idx)
        jax.block_until_ready(out)
        ref = self_attention_ref(U, params, field_idx)
        assert out.shape == (B, n_field_info)
        assert bool(jnp.all(jnp.isfinite(out)))
        assert bool(jnp.allclose(out, ref, rtol=1e-5, atol=1e-5)), \
            f"field_idx={field_idx}: max abs err = {float(jnp.max(jnp.abs(out - ref)))}"

    print("KERNEL_OK")
</pallas_src>

<mosaic_0001>
module attributes {stable_mosaic.version = 11 : i64} {
  func.func @_self_attention_kernel(%arg0: i32, %arg1: memref<8x32x4xf32, #tpu.memory_space<vmem>>, %arg2: memref<4x96xf32, #tpu.memory_space<vmem>>, %arg3: memref<1x96xf32, #tpu.memory_space<vmem>>, %arg4: memref<8x32xf32, #tpu.memory_space<vmem>>) attributes {dimension_semantics = [#tpu.dimension_semantics<parallel>], iteration_bounds = array<i64: 1>, scalar_prefetch = 0 : i64, scratch_operands = 0 : i64, tpu.core_type = #tpu.core_type<tc>, window_params = [{transform_indices = @transform_0, window_bounds = array<i64: 8, 32, 4>}, {pipeline_mode = #tpu.pipeline_mode<synchronous>, transform_indices = @transform_1, window_bounds = array<i64: 4, 96>}, {pipeline_mode = #tpu.pipeline_mode<synchronous>, transform_indices = @transform_2, window_bounds = array<i64: 1, 96>}, {transform_indices = @transform_3, window_bounds = array<i64: 8, 32>}]} {
    %c0 = arith.constant 0 : index
    %c0_0 = arith.constant 0 : index
    %c0_1 = arith.constant 0 : index
    %0 = vector.load %arg1[%c0, %c0_0, %c0_1] : memref<8x32x4xf32, #tpu.memory_space<vmem>>, vector<8x32x4xf32>
    %1 = vector.shape_cast %0 : vector<8x32x4xf32> to vector<256x4xf32>
    %c0_2 = arith.constant 0 : index
    %c0_3 = arith.constant 0 : index
    %2 = vector.load %arg2[%c0_2, %c0_3] : memref<4x96xf32, #tpu.memory_space<vmem>>, vector<4x96xf32>
    %cst = arith.constant dense<0.000000e+00> : vector<256x96xf32>
    %3 = tpu.matmul %1, %2, %cst {dimension_numbers = #tpu.dot_dimension_numbers<[1], [0], [0], [1], [0, 0, 1, 1], [], []>} : vector<256x4xf32>, vector<4x96xf32>, vector<256x96xf32> -> vector<256x96xf32>
    %c0_4 = arith.constant 0 : index
    %c0_5 = arith.constant 0 : index
    %4 = vector.load %arg3[%c0_4, %c0_5] : memref<1x96xf32, #tpu.memory_space<vmem>>, vector<1x96xf32>
    %5 = vector.broadcast %4 : vector<1x96xf32> to vector<256x96xf32>
    %6 = arith.addf %3, %5 : vector<256x96xf32>
    %7 = vector.extract_strided_slice %6 {offsets = [0, 0], sizes = [256, 32], strides = [1, 1]} : vector<256x96xf32> to vector<256x32xf32>
    %8 = vector.shape_cast %7 : vector<256x32xf32> to vector<8x32x32xf32>
    %9 = vector.extract_strided_slice %6 {offsets = [0, 32], sizes = [256, 32], strides = [1, 1]} : vector<256x96xf32> to vector<256x32xf32>
    %10 = vector.shape_cast %9 : vector<256x32xf32> to vector<8x32x32xf32>
    %11 = vector.extract_strided_slice %6 {offsets = [0, 64], sizes = [256, 32], strides = [1, 1]} : vector<256x96xf32> to vector<256x32xf32>
    %12 = vector.shape_cast %11 : vector<256x32xf32> to vector<8x32x32xf32>
    "tpu.trace_start"() <{level = 10 : i32, message = "bse,bte->bst"}> : () -> ()
    %cst_6 = arith.constant dense<0.000000e+00> : vector<8x32x32xf32>
    %13 = tpu.matmul %8, %10, %cst_6 {dimension_numbers = #tpu.dot_dimension_numbers<[2], [2], [1], [1], [0, 0, 0, 1, 1, 1], [0], [0]>} : vector<8x32x32xf32>, vector<8x32x32xf32>, vector<8x32x32xf32> -> vector<8x32x32xf32>
    "tpu.trace_stop"() : () -> ()
    %cst_7 = arith.constant 5.000000e-01 : f32
    %14 = vector.broadcast %cst_7 : f32 to vector<8x32x32xf32>
    %15 = arith.mulf %13, %14 : vector<8x32x32xf32>
    %cst_8 = arith.constant dense<0xFF800000> : vector<8x32xf32>
    %16 = vector.multi_reduction <maximumf>, %15, %cst_8 [2] : vector<8x32x32xf32> to vector<8x32xf32>
    %17 = vector.shape_cast %16 : vector<8x32xf32> to vector<8x32x1xf32>
    %18 = vector.broadcast %17 : vector<8x32x1xf32> to vector<8x32x32xf32>
    %19 = arith.subf %15, %18 : vector<8x32x32xf32>
    %20 = math.exp %19 : vector<8x32x32xf32>
    %cst_9 = arith.constant dense<0.000000e+00> : vector<8x32xf32>
    %21 = vector.multi_reduction <add>, %20, %cst_9 [2] : vector<8x32x32xf32> to vector<8x32xf32>
    "tpu.trace_start"() <{level = 10 : i32, message = "bst,bte->bse"}> : () -> ()
    %cst_10 = arith.constant dense<0.000000e+00> : vector<8x32x32xf32>
    %22 = tpu.matmul %20, %12, %cst_10 {dimension_numbers = #tpu.dot_dimension_numbers<[2], [1], [1], [2], [0, 0, 0, 1, 1, 2], [0], [0]>} : vector<8x32x32xf32>, vector<8x32x32xf32>, vector<8x32x32xf32> -> vector<8x32x32xf32>
    "tpu.trace_stop"() : () -> ()
    %cst_11 = arith.constant dense<0.000000e+00> : vector<8x32xf32>
    %23 = vector.multi_reduction <add>, %22, %cst_11 [2] : vector<8x32x32xf32> to vector<8x32xf32>
    %cst_12 = arith.constant 3.200000e+01 : f32
    %24 = vector.broadcast %cst_12 : f32 to vector<8x32xf32>
    %25 = arith.mulf %21, %24 : vector<8x32xf32>
    %26 = tpu.reciprocal %25 : vector<8x32xf32> -> vector<8x32xf32>
    %27 = arith.mulf %23, %26 : vector<8x32xf32>
    %cst_13 = arith.constant dense<0.000000e+00> : vector<8x32xf32>
    %28 = vector.multi_reduction <add>, %0, %cst_13 [2] : vector<8x32x4xf32> to vector<8x32xf32>
    %cst_14 = arith.constant 4.000000e+00 : f32
    %29 = vector.broadcast %cst_14 : f32 to vector<8x32xf32>
    %30 = arith.divf %28, %29 : vector<8x32xf32>
    %31 = arith.addf %27, %30 : vector<8x32xf32>
    %c0_15 = arith.constant 0 : index
    %c0_16 = arith.constant 0 : index
    %32 = vector.load %arg4[%c0_15, %c0_16] : memref<8x32xf32, #tpu.memory_space<vmem>>, vector<8x32xf32>
    tpu.vector_store %arg4[%c0_15, %c0_16], %31 {strides = array<i32>} : memref<8x32xf32, #tpu.memory_space<vmem>>, vector<8x32xf32>,
    return
  }
  func.func @transform_0(%arg0: i32) -> (i32, i32, i32) {
    %c0_i32 = arith.constant 0 : i32
    %c0_i32_0 = arith.constant 0 : i32
    %c0_i32_1 = arith.constant 0 : i32
    return %arg0, %c0_i32, %c0_i32_0 : i32, i32, i32
  }
  func.func @transform_1(%arg0: i32) -> (i32, i32) {
    %c0_i32 = arith.constant 0 : i32
    %c0_i32_0 = arith.constant 0 : i32
    %c0_i32_1 = arith.constant 0 : i32
    return %c0_i32, %c0_i32_0 : i32, i32
  }
  func.func @transform_2(%arg0: i32) -> (i32, i32) {
    %c0_i32 = arith.constant 0 : i32
    %c0_i32_0 = arith.constant 0 : i32
    %c0_i32_1 = arith.constant 0 : i32
    return %c0_i32, %c0_i32_0 : i32, i32
  }
  func.func @transform_3(%arg0: i32) -> (i32, i32) {
    %c0_i32 = arith.constant 0 : i32
    %c0_i32_0 = arith.constant 0 : i32
    return %arg0, %c0_i32 : i32, i32
  }
}

</mosaic_0001>

<llo_original>
// kernel: tpu_custom_call.1
$region0: #{tpu_custom_call.1}
  #allocation0 [shape = 'u32[]', space=smem, size = 0x4, offset = 0x4, fixed_abs, tag = 'smem constant byte address 0x4 - core index']
  #allocation1 [shape = 'u32[72,128]{1,0:T(1,128)}', space=vmem, size = 0x9000, scoped, tag = 'internal scratch']
  %s0 = inlined_call_operand.vmem [shape: f32[8,32,4], index: 0, kind: input, shape index: {}]
  %s1 = inlined_call_operand.vmem [shape: f32[4,96], index: 1, kind: input, shape index: {}]
  %s2 = inlined_call_operand.vmem [shape: f32[1,96], index: 2, kind: input, shape index: {}]
  %s3 = inlined_call_operand.hbm [shape: f32[8,32], index: 3, kind: output, shape index: {}]
  %s4 = sld [smem:[#allocation0]]
  $region22: #{tpu_custom_call.1} parent=0
    _
  %s6 = ssub.s32 1, %s4
  %s7 = scalar_select 0, %s6, %s4
  $region1: #{tpu_custom_call.1} parent=0
    #allocation2 [shape = 'u8[4096]{0}', space=vmem, size = 0x1000, scoped, tag = 'output window, operand 0, single buffered']
    #allocation3 [shape = 's32[1]{0}', space=sflag, size = 0x4, scoped, tag = 'scoped memory for tpu_custom_call.1']
    %8 = vsyncpa [#allocation3], 0
    // Predicated region
    $region2: #{tpu_custom_call.1} parent=1 // pred_check
      _
    $region3: #{tpu_custom_call.1} parent=1 // pred_check_branch
      %10 = sbr.rel (0) target = $region5
    $region4: #{tpu_custom_call.1} parent=1 // pred_region
      _
    $region5: #{tpu_custom_call.1} parent=1 // pred_fallthru
      _
    // Predicated region
    $region6: #{tpu_custom_call.1} parent=1 // pred_check
      _
    $region7: #{tpu_custom_call.1} parent=1 // pred_check_branch
      %12 = sbr.rel (0) target = $region9
    $region8: #{tpu_custom_call.1} parent=1 // pred_region
      _
    $region9: #{tpu_custom_call.1} parent=1 // pred_fallthru
      _
    // Predicated region
    $region10: #{tpu_custom_call.1} parent=1 // pred_check
      _
    $region11: #{tpu_custom_call.1} parent=1 // pred_check_branch
      %14 = sbr.rel (0) target = $region13
    $region12: #{tpu_custom_call.1} parent=1 // pred_region
      _
    $region13: #{tpu_custom_call.1} parent=1 // pred_fallthru
      _
    %v15 = vld [vmem:[%s0] sm:$0xff]
    %v16 = vld [vmem:[%s0 + $0x8] sm:$0xff]
    %v17 = vld [vmem:[%s0 + $0x10] sm:$0xff]
    %v18 = vld [vmem:[%s0 + $0x18] sm:$0xff]
    %v19 = vld [vmem:[%s0 + $0x20] sm:$0xff]
    %v20 = vld [vmem:[%s0 + $0x28] sm:$0xff]
    %v21 = vld [vmem:[%s0 + $0x30] sm:$0xff]
    %v22 = vld [vmem:[%s0 + $0x38] sm:$0xff]
    %v23 = vld [vmem:[%s0 + $0x40] sm:$0xff]
    %v24 = vld [vmem:[%s0 + $0x48] sm:$0xff]
    %v25 = vld [vmem:[%s0 + $0x50] sm:$0xff]
    %v26 = vld [vmem:[%s0 + $0x58] sm:$0xff]
    %v27 = vld [vmem:[%s0 + $0x60] sm:$0xff]
    %v28 = vld [vmem:[%s0 + $0x68] sm:$0xff]
    %v29 = vld [vmem:[%s0 + $0x70] sm:$0xff]
    %v30 = vld [vmem:[%s0 + $0x78] sm:$0xff]
    %v31 = vld [vmem:[%s0 + $0x80] sm:$0xff]
    %v32 = vld [vmem:[%s0 + $0x88] sm:$0xff]
    %v33 = vld [vmem:[%s0 + $0x90] sm:$0xff]
    %v34 = vld [vmem:[%s0 + $0x98] sm:$0xff]
    %v35 = vld [vmem:[%s0 + $0xa0] sm:$0xff]
    %v36 = vld [vmem:[%s0 + $0xa8] sm:$0xff]
    %v37 = vld [vmem:[%s0 + $0xb0] sm:$0xff]
    %v38 = vld [vmem:[%s0 + $0xb8] sm:$0xff]
    %v39 = vld [vmem:[%s0 + $0xc0] sm:$0xff]
    %v40 = vld [vmem:[%s0 + $0xc8] sm:$0xff]
    %v41 = vld [vmem:[%s0 + $0xd0] sm:$0xff]
    %v42 = vld [vmem:[%s0 + $0xd8] sm:$0xff]
    %v43 = vld [vmem:[%s0 + $0xe0] sm:$0xff]
    %v44 = vld [vmem:[%s0 + $0xe8] sm:$0xff]
    %v45 = vld [vmem:[%s0 + $0xf0] sm:$0xff]
    %v46 = vld [vmem:[%s0 + $0xf8] sm:$0xff]
    %v47 = vld [vmem:[%s1] sm:$0xf]
    %v48 = vld [vmem:[%s2] sm:$0x1]
    %v50 = vperm.slane %v48, 0
    %vm52 = vcmask 31744
    %v54 = vsel %vm52, %v15, 0
    %v57 = vsel %vm52, %v16, 0
    %v60 = vsel %vm52, %v17, 0
    %v63 = vsel %vm52, %v18, 0
    %v66 = vsel %vm52, %v19, 0
    %v69 = vsel %vm52, %v20, 0
    %v72 = vsel %vm52, %v21, 0
    %v75 = vsel %vm52, %v22, 0
    %v78 = vsel %vm52, %v23, 0
    %v81 = vsel %vm52, %v24, 0
    %v84 = vsel %vm52, %v25, 0
    %v87 = vsel %vm52, %v26, 0
    %v90 = vsel %vm52, %v27, 0
    %v93 = vsel %vm52, %v28, 0
    %v96 = vsel %vm52, %v29, 0
    %v99 = vsel %vm52, %v30, 0
    %v102 = vsel %vm52, %v31, 0
    %v105 = vsel %vm52, %v32, 0
    %v108 = vsel %vm52, %v33, 0
    %v111 = vsel %vm52, %v34, 0
    %v114 = vsel %vm52, %v35, 0
    %v117 = vsel %vm52, %v36, 0
    %v120 = vsel %vm52, %v37, 0
    %v123 = vsel %vm52, %v38, 0
    %v126 = vsel %vm52, %v39, 0
    %v129 = vsel %vm52, %v40, 0
    %v132 = vsel %vm52, %v41, 0
    %v135 = vsel %vm52, %v42, 0
    %v138 = vsel %vm52, %v43, 0
    %v141 = vsel %vm52, %v44, 0
    %v144 = vsel %vm52, %v45, 0
    %v147 = vsel %vm52, %v46, 0
    %vm149 = vcmask 1043456
    %v151 = vsel %vm149, %v47, 0
    %153 = vmatpush.msra.mxu0 0.0
    %154 = vmatpush.msra.mxu0 0.0
    %155 = vmatpush.msra.mxu0 0.0
    %156 = vmatpush.msra.mxu0 0.0
    %157 = vmatpush.msra.mxu0 0.0
    %158 = vmatpush.msra.mxu0 0.0
    %159 = vmatpush.msra.mxu0 0.0
    %160 = vmatpush.msra.mxu0 0.0
    %161 = vmatpush.msra.mxu0 0.0
    %162 = vmatpush.msra.mxu0 0.0
    %163 = vmatpush.msra.mxu0 0.0
    %164 = vmatpush.msra.mxu0 0.0
    %165 = vmatpush.msra.mxu0 0.0
    %166 = vmatpush.msra.mxu0 0.0
    %167 = vmatpush.msra.mxu0 0.0
    %168 = vmatpush.msra.mxu0 %v151
    %169 = vmatmul.f32.gmra.mxu0 %v54
    %v170 = vpop.f32.mrf.mxu0
    %v171 = vadd.f32 %v50, %v170
    %172 = vmatmul.f32.gmra.mxu0 %v57
    %v173 = vpop.f32.mrf.mxu0
    %v174 = vadd.f32 %v50, %v173
    %175 = vmatmul.f32.gmra.mxu0 %v60
    %v176 = vpop.f32.mrf.mxu0
    %v177 = vadd.f32 %v50, %v176
    %178 = vmatmul.f32.gmra.mxu0 %v63
    %v179 = vpop.f32.mrf.mxu0
    %v180 = vadd.f32 %v50, %v179
    %181 = vmatmul.f32.gmra.mxu0 %v66
    %v182 = vpop.f32.mrf.mxu0
    %v183 = vadd.f32 %v50, %v182
    %184 = vmatmul.f32.gmra.mxu0 %v69
    %v185 = vpop.f32.mrf.mxu0
    %v186 = vadd.f32 %v50, %v185
    %187 = vmatmul.f32.gmra.mxu0 %v72
    %v188 = vpop.f32.mrf.mxu0
    %v189 = vadd.f32 %v50, %v188
    %190 = vmatmul.f32.gmra.mxu0 %v75
    %v191 = vpop.f32.mrf.mxu0
    %v192 = vadd.f32 %v50, %v191
    %193 = vmatmul.f32.gmra.mxu0 %v78
    %v194 = vpop.f32.mrf.mxu0
    %v195 = vadd.f32 %v50, %v194
    %196 = vmatmul.f32.gmra.mxu0 %v81
    %v197 = vpop.f32.mrf.mxu0
    %v198 = vadd.f32 %v50, %v197
    %199 = vmatmul.f32.gmra.mxu0 %v84
    %v200 = vpop.f32.mrf.mxu0
    %v201 = vadd.f32 %v50, %v200
    %202 = vmatmul.f32.gmra.mxu0 %v87
    %v203 = vpop.f32.mrf.mxu0
    %v204 = vadd.f32 %v50, %v203
    %205 = vmatmul.f32.gmra.mxu0 %v90
    %v206 = vpop.f32.mrf.mxu0
    %v207 = vadd.f32 %v50, %v206
    %208 = vmatmul.f32.gmra.mxu0 %v93
    %v209 = vpop.f32.mrf.mxu0
    %v210 = vadd.f32 %v50, %v209
    %211 = vmatmul.f32.gmra.mxu0 %v96
    %v212 = vpop.f32.mrf.mxu0
    %v213 = vadd.f32 %v50, %v212
    %214 = vmatmul.f32.gmra.mxu0 %v99
    %v215 = vpop.f32.mrf.mxu0
    %v216 = vadd.f32 %v50, %v215
    %217 = vmatmul.f32.gmra.mxu0 %v102
    %v218 = vpop.f32.mrf.mxu0
    %v219 = vadd.f32 %v50, %v218
    %220 = vmatmul.f32.gmra.mxu0 %v105
    %v221 = vpop.f32.mrf.mxu0
    %v222 = vadd.f32 %v50, %v221
    %223 = vmatmul.f32.gmra.mxu0 %v108
    %v224 = vpop.f32.mrf.mxu0
    %v225 = vadd.f32 %v50, %v224
    %226 = vmatmul.f32.gmra.mxu0 %v111
    %v227 = vpop.f32.mrf.mxu0
    %v228 = vadd.f32 %v50, %v227
    %229 = vmatmul.f32.gmra.mxu0 %v114
    %v230 = vpop.f32.mrf.mxu0
    %v231 = vadd.f32 %v50, %v230
    %232 = vmatmul.f32.gmra.mxu0 %v117
    %v233 = vpop.f32.mrf.mxu0
    %v234 = vadd.f32 %v50, %v233
    %235 = vmatmul.f32.gmra.mxu0 %v120
    %v236 = vpop.f32.mrf.mxu0
    %v237 = vadd.f32 %v50, %v236
    %238 = vmatmul.f32.gmra.mxu0 %v123
    %v239 = vpop.f32.mrf.mxu0
    %v240 = vadd.f32 %v50, %v239
    %241 = vmatmul.f32.gmra.mxu0 %v126
    %v242 = vpop.f32.mrf.mxu0
    %v243 = vadd.f32 %v50, %v242
    %244 = vmatmul.f32.gmra.mxu0 %v129
    %v245 = vpop.f32.mrf.mxu0
    %v246 = vadd.f32 %v50, %v245
    %247 = vmatmul.f32.gmra.mxu0 %v132
    %v248 = vpop.f32.mrf.mxu0
    %v249 = vadd.f32 %v50, %v248
    %250 = vmatmul.f32.gmra.mxu0 %v135
    %v251 = vpop.f32.mrf.mxu0
    %v252 = vadd.f32 %v50, %v251
    %253 = vmatmul.f32.gmra.mxu0 %v138
    %v254 = vpop.f32.mrf.mxu0
    %v255 = vadd.f32 %v50, %v254
    %256 = vmatmul.f32.gmra.mxu0 %v141
    %v257 = vpop.f32.mrf.mxu0
    %v258 = vadd.f32 %v50, %v257
    %259 = vmatmul.f32.gmra.mxu0 %v144
    %v260 = vpop.f32.mrf.mxu0
    %v261 = vadd.f32 %v50, %v260
    %262 = vmatmul.f32.gmra.mxu0 %v147
    %v263 = vpop.f32.mrf.mxu0
    %v264 = vadd.f32 %v50, %v263
    %265 = vdwg.mxu0
    %270 = vrot.lane.b32.xlu0 %v171, 96
    %v271 = vpop.permute.xlu0 %270
    %272 = vrot.lane.b32.xlu0 %v174, 96
    %v273 = vpop.permute.xlu0 %272
    %274 = vrot.lane.b32.xlu0 %v177, 96
    %v275 = vpop.permute.xlu0 %274
    %276 = vrot.lane.b32.xlu0 %v180, 96
    %v277 = vpop.permute.xlu0 %276
    %vm278 = vcmask 261120
    %v279 = vsel %vm278, %v171, 0
    %v281 = vsel %vm278, %v174, 0
    %v283 = vsel %vm278, %v177, 0
    %v285 = vsel %vm278, %v180, 0
    %v287 = vsel %vm278, %v271, 0
    %v289 = vsel %vm278, %v273, 0
    %v291 = vsel %vm278, %v275, 0
    %v293 = vsel %vm278, %v277, 0
    %295 = vmatpush.xpose.msra.mxu0 0.0
    %296 = vmatpush.xpose.msra.mxu0 0.0
    %297 = vmatpush.xpose.msra.mxu0 0.0
    %298 = vmatpush.xpose.msra.mxu0 0.0
    %299 = vmatpush.xpose.msra.mxu0 0.0
    %300 = vmatpush.xpose.msra.mxu0 0.0
    %301 = vmatpush.xpose.msra.mxu0 0.0
    %302 = vmatpush.xpose.msra.mxu0 0.0
    %303 = vmatpush.xpose.msra.mxu0 0.0
    %304 = vmatpush.xpose.msra.mxu0 0.0
    %305 = vmatpush.xpose.msra.mxu0 0.0
    %306 = vmatpush.xpose.msra.mxu0 0.0
    %307 = vmatpush.xpose.msra.mxu0 %v293
    %308 = vmatpush.xpose.msra.mxu0 %v291
    %309 = vmatpush.xpose.msra.mxu0 %v289
    %310 = vmatpush.xpose.msra.mxu0 %v287
    %311 = vmatmul.f32.gmra.mxu0 %v279
    %v312 = vpop.f32.mrf.mxu0
    %v313 = vadd.f32 0.0, %v312
    %314 = vmatmul.f32.gmra.mxu0 %v281
    %v315 = vpop.f32.mrf.mxu0
    %v316 = vadd.f32 0.0, %v315
    %317 = vmatmul.f32.gmra.mxu0 %v283
    %v318 = vpop.f32.mrf.mxu0
    %v319 = vadd.f32 0.0, %v318
    %320 = vmatmul.f32.gmra.mxu0 %v285
    %v321 = vpop.f32.mrf.mxu0
    %v322 = vadd.f32 0.0, %v321
    %323 = vdwg.mxu0
    %328 = vrot.lane.b32.xlu0 %v183, 96
    %v329 = vpop.permute.xlu0 %328
    %330 = vrot.lane.b32.xlu0 %v186, 96
    %v331 = vpop.permute.xlu0 %330
    %332 = vrot.lane.b32.xlu0 %v189, 96
    %v333 = vpop.permute.xlu0 %332
    %334 = vrot.lane.b32.xlu0 %v192, 96
    %v335 = vpop.permute.xlu0 %334
    %v336 = vsel %vm278, %v183, 0
    %v338 = vsel %vm278, %v186, 0
    %v340 = vsel %vm278, %v189, 0
    %v342 = vsel %vm278, %v192, 0
    %v344 = vsel %vm278, %v329, 0
    %v346 = vsel %vm278, %v331, 0
    %v348 = vsel %vm278, %v333, 0
    %v350 = vsel %vm278, %v335, 0
    %352 = vmatpush.xpose.msra.mxu0 0.0
    %353 = vmatpush.xpose.msra.mxu0 0.0
    %354 = vmatpush.xpose.msra.mxu0 0.0
    %355 = vmatpush.xpose.msra.mxu0 0.0
    %356 = vmatpush.xpose.msra.mxu0 0.0
    %357 = vmatpush.xpose.msra.mxu0 0.0
    %358 = vmatpush.xpose.msra.mxu0 0.0
    %359 = vmatpush.xpose.msra.mxu0 0.0
    %360 = vmatpush.xpose.msra.mxu0 0.0
    %361 = vmatpush.xpose.msra.mxu0 0.0
    %362 = vmatpush.xpose.msra.mxu0 0.0
    %363 = vmatpush.xpose.msra.mxu0 0.0
    %364 = vmatpush.xpose.msra.mxu0 %v350
    %365 = vmatpush.xpose.msra.mxu0 %v348
    %366 = vmatpush.xpose.msra.mxu0 %v346
    %367 = vmatpush.xpose.msra.mxu0 %v344
    %368 = vmatmul.f32.gmra.mxu0 %v336
    %v369 = vpop.f32.mrf.mxu0
    %v370 = vadd.f32 0.0, %v369
    %371 = vmatmul.f32.gmra.mxu0 %v338
    %v372 = vpop.f32.mrf.mxu0
    %v373 = vadd.f32 0.0, %v372
    %374 = vmatmul.f32.gmra.mxu0 %v340
    %v375 = vpop.f32.mrf.mxu0
    %v376 = vadd.f32 0.0, %v375
    %377 = vmatmul.f32.gmra.mxu0 %v342
    %v378 = vpop.f32.mrf.mxu0
    %v379 = vadd.f32 0.0, %v378
    %380 = vdwg.mxu0
    %385 = vrot.lane.b32.xlu0 %v195, 96
    %v386 = vpop.permute.xlu0 %385
    %387 = vrot.lane.b32.xlu0 %v198, 96
    %v388 = vpop.permute.xlu0 %387
    %389 = vrot.lane.b32.xlu0 %v201, 96
    %v390 = vpop.permute.xlu0 %389
    %391 = vrot.lane.b32.xlu0 %v204, 96
    %v392 = vpop.permute.xlu0 %391
    %v393 = vsel %vm278, %v195, 0
    %v395 = vsel %vm278, %v198, 0
    %v397 = vsel %vm278, %v201, 0
    %v399 = vsel %vm278, %v204, 0
    %v401 = vsel %vm278, %v386, 0
    %v403 = vsel %vm278, %v388, 0
    %v405 = vsel %vm278, %v390, 0
    %v407 = vsel %vm278, %v392, 0
    %409 = vmatpush.xpose.msra.mxu0 0.0
    %410 = vmatpush.xpose.msra.mxu0 0.0
    %411 = vmatpush.xpose.msra.mxu0 0.0
    %412 = vmatpush.xpose.msra.mxu0 0.0
    %413 = vmatpush.xpose.msra.mxu0 0.0
    %414 = vmatpush.xpose.msra.mxu0 0.0
    %415 = vmatpush.xpose.msra.mxu0 0.0
    %416 = vmatpush.xpose.msra.mxu0 0.0
    %417 = vmatpush.xpose.msra.mxu0 0.0
    %418 = vmatpush.xpose.msra.mxu0 0.0
    %419 = vmatpush.xpose.msra.mxu0 0.0
    %420 = vmatpush.xpose.msra.mxu0 0.0
    %421 = vmatpush.xpose.msra.mxu0 %v407
    %422 = vmatpush.xpose.msra.mxu0 %v405
    %423 = vmatpush.xpose.msra.mxu0 %v403
    %424 = vmatpush.xpose.msra.mxu0 %v401
    %425 = vmatmul.f32.gmra.mxu0 %v393
    %v426 = vpop.f32.mrf.mxu0
    %v427 = vadd.f32 0.0, %v426
    %428 = vmatmul.f32.gmra.mxu0 %v395
    %v429 = vpop.f32.mrf.mxu0
    %v430 = vadd.f32 0.0, %v429
    %431 = vmatmul.f32.gmra.mxu0 %v397
    %v432 = vpop.f32.mrf.mxu0
    %v433 = vadd.f32 0.0, %v432
    %434 = vmatmul.f32.gmra.mxu0 %v399
    %v435 = vpop.f32.mrf.mxu0
    %v436 = vadd.f32 0.0, %v435
    %437 = vdwg.mxu0
    %442 = vrot.lane.b32.xlu0 %v207, 96
    %v443 = vpop.permute.xlu0 %442
    %444 = vrot.lane.b32.xlu0 %v210, 96
    %v445 = vpop.permute.xlu0 %444
    %446 = vrot.lane.b32.xlu0 %v213, 96
    %v447 = vpop.permute.xlu0 %446
    %448 = vrot.lane.b32.xlu0 %v216, 96
    %v449 = vpop.permute.xlu0 %448
    %v450 = vsel %vm278, %v207, 0
    %v452 = vsel %vm278, %v210, 0
    %v454 = vsel %vm278, %v213, 0
    %v456 = vsel %vm278, %v216, 0
    %v458 = vsel %vm278, %v443, 0
    %v460 = vsel %vm278, %v445, 0
    %v462 = vsel %vm278, %v447, 0
    %v464 = vsel %vm278, %v449, 0
    %466 = vmatpush.xpose.msra.mxu0 0.0
    %467 = vmatpush.xpose.msra.mxu0 0.0
    %468 = vmatpush.xpose.msra.mxu0 0.0
    %469 = vmatpush.xpose.msra.mxu0 0.0
    %470 = vmatpush.xpose.msra.mxu0 0.0
    %471 = vmatpush.xpose.msra.mxu0 0.0
    %472 = vmatpush.xpose.msra.mxu0 0.0
    %473 = vmatpush.xpose.msra.mxu0 0.0
    %474 = vmatpush.xpose.msra.mxu0 0.0
    %475 = vmatpush.xpose.msra.mxu0 0.0
    %476 = vmatpush.xpose.msra.mxu0 0.0
    %477 = vmatpush.xpose.msra.mxu0 0.0
    %478 = vmatpush.xpose.msra.mxu0 %v464
    %479 = vmatpush.xpose.msra.mxu0 %v462
    %480 = vmatpush.xpose.msra.mxu0 %v460
    %481 = vmatpush.xpose.msra.mxu0 %v458
    %482 = vmatmul.f32.gmra.mxu0 %v450
    %v483 = vpop.f32.mrf.mxu0
    %v484 = vadd.f32 0.0, %v483
    %485 = vmatmul.f32.gmra.mxu0 %v452
    %v486 = vpop.f32.mrf.mxu0
    %v487 = vadd.f32 0.0, %v486
    %488 = vmatmul.f32.gmra.mxu0 %v454
    %v489 = vpop.f32.mrf.mxu0
    %v490 = vadd.f32 0.0, %v489
    %491 = vmatmul.f32.gmra.mxu0 %v456
    %v492 = vpop.f32.mrf.mxu0
    %v493 = vadd.f32 0.0, %v492
    %494 = vdwg.mxu0
    %499 = vrot.lane.b32.xlu0 %v219, 96
    %v500 = vpop.permute.xlu0 %499
    %501 = vrot.lane.b32.xlu0 %v222, 96
    %v502 = vpop.permute.xlu0 %501
    %503 = vrot.lane.b32.xlu0 %v225, 96
    %v504 = vpop.permute.xlu0 %503
    %505 = vrot.lane.b32.xlu0 %v228, 96
    %v506 = vpop.permute.xlu0 %505
    %v507 = vsel %vm278, %v219, 0
    %v509 = vsel %vm278, %v222, 0
    %v511 = vsel %vm278, %v225, 0
    %v513 = vsel %vm278, %v228, 0
    %v515 = vsel %vm278, %v500, 0
    %v517 = vsel %vm278, %v502, 0
    %v519 = vsel %vm278, %v504, 0
    %v521 = vsel %vm278, %v506, 0
    %523 = vmatpush.xpose.msra.mxu0 0.0
    %524 = vmatpush.xpose.msra.mxu0 0.0
    %525 = vmatpush.xpose.msra.mxu0 0.0
    %526 = vmatpush.xpose.msra.mxu0 0.0
    %527 = vmatpush.xpose.msra.mxu0 0.0
    %528 = vmatpush.xpose.msra.mxu0 0.0
    %529 = vmatpush.xpose.msra.mxu0 0.0
    %530 = vmatpush.xpose.msra.mxu0 0.0
    %531 = vmatpush.xpose.msra.mxu0 0.0
    %532 = vmatpush.xpose.msra.mxu0 0.0
    %533 = vmatpush.xpose.msra.mxu0 0.0
    %534 = vmatpush.xpose.msra.mxu0 0.0
    %535 = vmatpush.xpose.msra.mxu0 %v521
    %536 = vmatpush.xpose.msra.mxu0 %v519
    %537 = vmatpush.xpose.msra.mxu0 %v517
    %538 = vmatpush.xpose.msra.mxu0 %v515
    %539 = vmatmul.f32.gmra.mxu0 %v507
    %v540 = vpop.f32.mrf.mxu0
    %v541 = vadd.f32 0.0, %v540
    %542 = vmatmul.f32.gmra.mxu0 %v509
    %v543 = vpop.f32.mrf.mxu0
    %v544 = vadd.f32 0.0, %v543
    %545 = vmatmul.f32.gmra.mxu0 %v511
    %v546 = vpop.f32.mrf.mxu0
    %v547 = vadd.f32 0.0, %v546
    %548 = vmatmul.f32.gmra.mxu0 %v513
    %v549 = vpop.f32.mrf.mxu0
    %v550 = vadd.f32 0.0, %v549
    %551 = vdwg.mxu0
    %556 = vrot.lane.b32.xlu0 %v231, 96
    %v557 = vpop.permute.xlu0 %556
    %558 = vrot.lane.b32.xlu0 %v234, 96
    %v559 = vpop.permute.xlu0 %558
    %560 = vrot.lane.b32.xlu0 %v237, 96
    %v561 = vpop.permute.xlu0 %560
    %562 = vrot.lane.b32.xlu0 %v240, 96
    %v563 = vpop.permute.xlu0 %562
    %v564 = vsel %vm278, %v231, 0
    %v566 = vsel %vm278, %v234, 0
    %v568 = vsel %vm278, %v237, 0
    %v570 = vsel %vm278, %v240, 0
    %v572 = vsel %vm278, %v557, 0
    %v574 = vsel %vm278, %v559, 0
    %v576 = vsel %vm278, %v561, 0
    %v578 = vsel %vm278, %v563, 0
    %580 = vmatpush.xpose.msra.mxu0 0.0
    %581 = vmatpush.xpose.msra.mxu0 0.0
    %582 = vmatpush.xpose.msra.mxu0 0.0
    %583 = vmatpush.xpose.msra.mxu0 0.0
    %584 = vmatpush.xpose.msra.mxu0 0.0
    %585 = vmatpush.xpose.msra.mxu0 0.0
    %586 = vmatpush.xpose.msra.mxu0 0.0
    %587 = vmatpush.xpose.msra.mxu0 0.0
    %588 = vmatpush.xpose.msra.mxu0 0.0
    %589 = vmatpush.xpose.msra.mxu0 0.0
    %590 = vmatpush.xpose.msra.mxu0 0.0
    %591 = vmatpush.xpose.msra.mxu0 0.0
    %592 = vmatpush.xpose.msra.mxu0 %v578
    %593 = vmatpush.xpose.msra.mxu0 %v576
    %594 = vmatpush.xpose.msra.mxu0 %v574
    %595 = vmatpush.xpose.msra.mxu0 %v572
    %596 = vmatmul.f32.gmra.mxu0 %v564
    %v597 = vpop.f32.mrf.mxu0
    %v598 = vadd.f32 0.0, %v597
    %599 = vmatmul.f32.gmra.mxu0 %v566
    %v600 = vpop.f32.mrf.mxu0
    %v601 = vadd.f32 0.0, %v600
    %602 = vmatmul.f32.gmra.mxu0 %v568
    %v603 = vpop.f32.mrf.mxu0
    %v604 = vadd.f32 0.0, %v603
    %605 = vmatmul.f32.gmra.mxu0 %v570
    %v606 = vpop.f32.mrf.mxu0
    %v607 = vadd.f32 0.0, %v606
    %608 = vdwg.mxu0
    %613 = vrot.lane.b32.xlu0 %v243, 96
    %v614 = vpop.permute.xlu0 %613
    %615 = vrot.lane.b32.xlu0 %v246, 96
    %v616 = vpop.permute.xlu0 %615
    %617 = vrot.lane.b32.xlu0 %v249, 96
    %v618 = vpop.permute.xlu0 %617
    %619 = vrot.lane.b32.xlu0 %v252, 96
    %v620 = vpop.permute.xlu0 %619
    %v621 = vsel %vm278, %v243, 0
    %v623 = vsel %vm278, %v246, 0
    %v625 = vsel %vm278, %v249, 0
    %v627 = vsel %vm278, %v252, 0
    %v629 = vsel %vm278, %v614, 0
    %v631 = vsel %vm278, %v616, 0
    %v633 = vsel %vm278, %v618, 0
    %v635 = vsel %vm278, %v620, 0
    %637 = vmatpush.xpose.msra.mxu0 0.0
    %638 = vmatpush.xpose.msra.mxu0 0.0
    %639 = vmatpush.xpose.msra.mxu0 0.0
    %640 = vmatpush.xpose.msra.mxu0 0.0
    %641 = vmatpush.xpose.msra.mxu0 0.0
    %642 = vmatpush.xpose.msra.mxu0 0.0
    %643 = vmatpush.xpose.msra.mxu0 0.0
    %644 = vmatpush.xpose.msra.mxu0 0.0
    %645 = vmatpush.xpose.msra.mxu0 0.0
    %646 = vmatpush.xpose.msra.mxu0 0.0
    %647 = vmatpush.xpose.msra.mxu0 0.0
    %648 = vmatpush.xpose.msra.mxu0 0.0
    %649 = vmatpush.xpose.msra.mxu0 %v635
    %650 = vmatpush.xpose.msra.mxu0 %v633
    %651 = vmatpush.xpose.msra.mxu0 %v631
    %652 = vmatpush.xpose.msra.mxu0 %v629
    %653 = vmatmul.f32.gmra.mxu0 %v621
    %v654 = vpop.f32.mrf.mxu0
    %v655 = vadd.f32 0.0, %v654
    %656 = vmatmul.f32.gmra.mxu0 %v623
    %v657 = vpop.f32.mrf.mxu0
    %v658 = vadd.f32 0.0, %v657
    %659 = vmatmul.f32.gmra.mxu0 %v625
    %v660 = vpop.f32.mrf.mxu0
    %v661 = vadd.f32 0.0, %v660
    %662 = vmatmul.f32.gmra.mxu0 %v627
    %v663 = vpop.f32.mrf.mxu0
    %v664 = vadd.f32 0.0, %v663
    %665 = vdwg.mxu0
    %670 = vrot.lane.b32.xlu0 %v255, 96
    %v671 = vpop.permute.xlu0 %670
    %672 = vrot.lane.b32.xlu0 %v258, 96
    %v673 = vpop.permute.xlu0 %672
    %674 = vrot.lane.b32.xlu0 %v261, 96
    %v675 = vpop.permute.xlu0 %674
    %676 = vrot.lane.b32.xlu0 %v264, 96
    %v677 = vpop.permute.xlu0 %676
    %v678 = vsel %vm278, %v255, 0
    %v680 = vsel %vm278, %v258, 0
    %v682 = vsel %vm278, %v261, 0
    %v684 = vsel %vm278, %v264, 0
    %v686 = vsel %vm278, %v671, 0
    %v688 = vsel %vm278, %v673, 0
    %v690 = vsel %vm278, %v675, 0
    %v692 = vsel %vm278, %v677, 0
    %694 = vmatpush.xpose.msra.mxu0 0.0
    %695 = vmatpush.xpose.msra.mxu0 0.0
    %696 = vmatpush.xpose.msra.mxu0 0.0
    %697 = vmatpush.xpose.msra.mxu0 0.0
    %698 = vmatpush.xpose.msra.mxu0 0.0
    %699 = vmatpush.xpose.msra.mxu0 0.0
    %700 = vmatpush.xpose.msra.mxu0 0.0
    %701 = vmatpush.xpose.msra.mxu0 0.0
    %702 = vmatpush.xpose.msra.mxu0 0.0
    %703 = vmatpush.xpose.msra.mxu0 0.0
    %704 = vmatpush.xpose.msra.mxu0 0.0
    %705 = vmatpush.xpose.msra.mxu0 0.0
    %706 = vmatpush.xpose.msra.mxu0 %v692
    %707 = vmatpush.xpose.msra.mxu0 %v690
    %708 = vmatpush.xpose.msra.mxu0 %v688
    %709 = vmatpush.xpose.msra.mxu0 %v686
    %710 = vmatmul.f32.gmra.mxu0 %v678
    %v711 = vpop.f32.mrf.mxu0
    %v712 = vadd.f32 0.0, %v711
    %713 = vmatmul.f32.gmra.mxu0 %v680
    %v714 = vpop.f32.mrf.mxu0
    %v715 = vadd.f32 0.0, %v714
    %716 = vmatmul.f32.gmra.mxu0 %v682
    %v717 = vpop.f32.mrf.mxu0
    %v718 = vadd.f32 0.0, %v717
    %719 = vmatmul.f32.gmra.mxu0 %v684
    %v720 = vpop.f32.mrf.mxu0
    %v721 = vadd.f32 0.0, %v720
    %722 = vdwg.mxu0
    %v723 = vmul.f32 %v313, 0.5
    %v724 = vmul.f32 %v316, 0.5
    %v725 = vmul.f32 %v319, 0.5
    %v726 = vmul.f32 %v322, 0.5
    %v727 = vmul.f32 %v370, 0.5
    %v728 = vmul.f32 %v373, 0.5
    %v729 = vmul.f32 %v376, 0.5
    %v730 = vmul.f32 %v379, 0.5
    %v731 = vmul.f32 %v427, 0.5
    %v732 = vmul.f32 %v430, 0.5
    %v733 = vmul.f32 %v433, 0.5
    %v734 = vmul.f32 %v436, 0.5
    %v735 = vmul.f32 %v484, 0.5
    %v736 = vmul.f32 %v487, 0.5
    %v737 = vmul.f32 %v490, 0.5
    %v738 = vmul.f32 %v493, 0.5
    %v739 = vmul.f32 %v541, 0.5
    %v740 = vmul.f32 %v544, 0.5
    %v741 = vmul.f32 %v547, 0.5
    %v742 = vmul.f32 %v550, 0.5
    %v743 = vmul.f32 %v598, 0.5
    %v744 = vmul.f32 %v601, 0.5
    %v745 = vmul.f32 %v604, 0.5
    %v746 = vmul.f32 %v607, 0.5
    %v747 = vmul.f32 %v655, 0.5
    %v748 = vmul.f32 %v658, 0.5
    %v749 = vmul.f32 %v661, 0.5
    %v750 = vmul.f32 %v664, 0.5
    %v751 = vmul.f32 %v712, 0.5
    %v752 = vmul.f32 %v715, 0.5
    %v753 = vmul.f32 %v718, 0.5
    %v754 = vmul.f32 %v721, 0.5
    %v755 = vsel %vm278, %v723, -inf
    %756 = vmax.xlane.f32.xlu0 %v755
    %v757 = vpop.xlane.xlu0 %756
    %v758 = vsel %vm278, %v724, -inf
    %759 = vmax.xlane.f32.xlu0 %v758
    %v760 = vpop.xlane.xlu0 %759
    %v761 = vsel %vm278, %v725, -inf
    %762 = vmax.xlane.f32.xlu0 %v761
    %v763 = vpop.xlane.xlu0 %762
    %v764 = vsel %vm278, %v726, -inf
    %765 = vmax.xlane.f32.xlu0 %v764
    %v766 = vpop.xlane.xlu0 %765
    %v767 = vsel %vm278, %v727, -inf
    %768 = vmax.xlane.f32.xlu0 %v767
    %v769 = vpop.xlane.xlu0 %768
    %v770 = vsel %vm278, %v728, -inf
    %771 = vmax.xlane.f32.xlu0 %v770
    %v772 = vpop.xlane.xlu0 %771
    %v773 = vsel %vm278, %v729, -inf
    %774 = vmax.xlane.f32.xlu0 %v773
    %v775 = vpop.xlane.xlu0 %774
    %v776 = vsel %vm278, %v730, -inf
    %777 = vmax.xlane.f32.xlu0 %v776
    %v778 = vpop.xlane.xlu0 %777
    %v779 = vsel %vm278, %v731, -inf
    %780 = vmax.xlane.f32.xlu0 %v779
    %v781 = vpop.xlane.xlu0 %780
    %v782 = vsel %vm278, %v732, -inf
    %783 = vmax.xlane.f32.xlu0 %v782
    %v784 = vpop.xlane.xlu0 %783
    %v785 = vsel %vm278, %v733, -inf
    %786 = vmax.xlane.f32.xlu0 %v785
    %v787 = vpop.xlane.xlu0 %786
    %v788 = vsel %vm278, %v734, -inf
    %789 = vmax.xlane.f32.xlu0 %v788
    %v790 = vpop.xlane.xlu0 %789
    %v791 = vsel %vm278, %v735, -inf
    %792 = vmax.xlane.f32.xlu0 %v791
    %v793 = vpop.xlane.xlu0 %792
    %v794 = vsel %vm278, %v736, -inf
    %795 = vmax.xlane.f32.xlu0 %v794
    %v796 = vpop.xlane.xlu0 %795
    %v797 = vsel %vm278, %v737, -inf
    %798 = vmax.xlane.f32.xlu0 %v797
    %v799 = vpop.xlane.xlu0 %798
    %v800 = vsel %vm278, %v738, -inf
    %801 = vmax.xlane.f32.xlu0 %v800
    %v802 = vpop.xlane.xlu0 %801
    %v803 = vsel %vm278, %v739, -inf
    %804 = vmax.xlane.f32.xlu0 %v803
    %v805 = vpop.xlane.xlu0 %804
    %v806 = vsel %vm278, %v740, -inf
    %807 = vmax.xlane.f32.xlu0 %v806
    %v808 = vpop.xlane.xlu0 %807
    %v809 = vsel %vm278, %v741, -inf
    %810 = vmax.xlane.f32.xlu0 %v809
    %v811 = vpop.xlane.xlu0 %810
    %v812 = vsel %vm278, %v742, -inf
    %813 = vmax.xlane.f32.xlu0 %v812
    %v814 = vpop.xlane.xlu0 %813
    %v815 = vsel %vm278, %v743, -inf
    %816 = vmax.xlane.f32.xlu0 %v815
    %v817 = vpop.xlane.xlu0 %816
    %v818 = vsel %vm278, %v744, -inf
    %819 = vmax.xlane.f32.xlu0 %v818
    %v820 = vpop.xlane.xlu0 %819
    %v821 = vsel %vm278, %v745, -inf
    %822 = vmax.xlane.f32.xlu0 %v821
    %v823 = vpop.xlane.xlu0 %822
    %v824 = vsel %vm278, %v746, -inf
    %825 = vmax.xlane.f32.xlu0 %v824
    %v826 = vpop.xlane.xlu0 %825
    %v827 = vsel %vm278, %v747, -inf
    %828 = vmax.xlane.f32.xlu0 %v827
    %v829 = vpop.xlane.xlu0 %828
    %v830 = vsel %vm278, %v748, -inf
    %831 = vmax.xlane.f32.xlu0 %v830
    %v832 = vpop.xlane.xlu0 %831
    %v833 = vsel %vm278, %v749, -inf
    %834 = vmax.xlane.f32.xlu0 %v833
    %v835 = vpop.xlane.xlu0 %834
    %v836 = vsel %vm278, %v750, -inf
    %837 = vmax.xlane.f32.xlu0 %v836
    %v838 = vpop.xlane.xlu0 %837
    %v839 = vsel %vm278, %v751, -inf
    %840 = vmax.xlane.f32.xlu0 %v839
    %v841 = vpop.xlane.xlu0 %840
    %v842 = vsel %vm278, %v752, -inf
    %843 = vmax.xlane.f32.xlu0 %v842
    %v844 = vpop.xlane.xlu0 %843
    %v845 = vsel %vm278, %v753, -inf
    %846 = vmax.xlane.f32.xlu0 %v845
    %v847 = vpop.xlane.xlu0 %846
    %v848 = vsel %vm278, %v754, -inf
    %849 = vmax.xlane.f32.xlu0 %v848
    %v850 = vpop.xlane.xlu0 %849
    %v851 = vsub.f32 %v723, %v757
    %v852 = vsub.f32 %v724, %v760
    %v853 = vsub.f32 %v725, %v763
    %v854 = vsub.f32 %v726, %v766
    %v855 = vsub.f32 %v727, %v769
    %v856 = vsub.f32 %v728, %v772
    %v857 = vsub.f32 %v729, %v775
    %v858 = vsub.f32 %v730, %v778
    %v859 = vsub.f32 %v731, %v781
    %v860 = vsub.f32 %v732, %v784
    %v861 = vsub.f32 %v733, %v787
    %v862 = vsub.f32 %v734, %v790
    %v863 = vsub.f32 %v735, %v793
    %v864 = vsub.f32 %v736, %v796
    %v865 = vsub.f32 %v737, %v799
    %v866 = vsub.f32 %v738, %v802
    %v867 = vsub.f32 %v739, %v805
    %v868 = vsub.f32 %v740, %v808
    %v869 = vsub.f32 %v741, %v811
    %v870 = vsub.f32 %v742, %v814
    %v871 = vsub.f32 %v743, %v817
    %v872 = vsub.f32 %v744, %v820
    %v873 = vsub.f32 %v745, %v823
    %v874 = vsub.f32 %v746, %v826
    %v875 = vsub.f32 %v747, %v829
    %v876 = vsub.f32 %v748, %v832
    %v877 = vsub.f32 %v749, %v835
    %v878 = vsub.f32 %v750, %v838
    %v879 = vsub.f32 %v751, %v841
    %v880 = vsub.f32 %v752, %v844
    %v881 = vsub.f32 %v753, %v847
    %v882 = vsub.f32 %v754, %v850
    %v883 = vmul.f32 %v851, 1.442695
    %v884 = vpow.pop %v883
    %v885 = vmul.f32 %v852, 1.442695
    %v886 = vpow.pop %v885
    %v887 = vmul.f32 %v853, 1.442695
    %v888 = vpow.pop %v887
    %v889 = vmul.f32 %v854, 1.442695
    %v890 = vpow.pop %v889
    %v891 = vmul.f32 %v855, 1.442695
    %v892 = vpow.pop %v891
    %v893 = vmul.f32 %v856, 1.442695
    %v894 = vpow.pop %v893
    %v895 = vmul.f32 %v857, 1.442695
    %v896 = vpow.pop %v895
    %v897 = vmul.f32 %v858, 1.442695
    %v898 = vpow.pop %v897
    %v899 = vmul.f32 %v859, 1.442695
    %v900 = vpow.pop %v899
    %v901 = vmul.f32 %v860, 1.442695
    %v902 = vpow.pop %v901
    %v903 = vmul.f32 %v861, 1.442695
    %v904 = vpow.pop %v903
    %v905 = vmul.f32 %v862, 1.442695
    %v906 = vpow.pop %v905
    %v907 = vmul.f32 %v863, 1.442695
    %v908 = vpow.pop %v907
    %v909 = vmul.f32 %v864, 1.442695
    %v910 = vpow.pop %v909
    %v911 = vmul.f32 %v865, 1.442695
    %v912 = vpow.pop %v911
    %v913 = vmul.f32 %v866, 1.442695
    %v914 = vpow.pop %v913
    %v915 = vmul.f32 %v867, 1.442695
    %v916 = vpow.pop %v915
    %v917 = vmul.f32 %v868, 1.442695
    %v918 = vpow.pop %v917
    %v919 = vmul.f32 %v869, 1.442695
    %v920 = vpow.pop %v919
    %v921 = vmul.f32 %v870, 1.442695
    %v922 = vpow.pop %v921
    %v923 = vmul.f32 %v871, 1.442695
    %v924 = vpow.pop %v923
    %v925 = vmul.f32 %v872, 1.442695
    %v926 = vpow.pop %v925
    %v927 = vmul.f32 %v873, 1.442695
    %v928 = vpow.pop %v927
    %v929 = vmul.f32 %v874, 1.442695
    %v930 = vpow.pop %v929
    %v931 = vmul.f32 %v875, 1.442695
    %v932 = vpow.pop %v931
    %v933 = vmul.f32 %v876, 1.442695
    %v934 = vpow.pop %v933
    %v935 = vmul.f32 %v877, 1.442695
    %v936 = vpow.pop %v935
    %v937 = vmul.f32 %v878, 1.442695
    %v938 = vpow.pop %v937
    %v939 = vmul.f32 %v879, 1.442695
    %v940 = vpow.pop %v939
    %v941 = vmul.f32 %v880, 1.442695
    %v942 = vpow.pop %v941
    %v943 = vmul.f32 %v881, 1.442695
    %v944 = vpow.pop %v943
    %v945 = vmul.f32 %v882, 1.442695
    %v946 = vpow.pop %v945
    %v947 = vsel %vm278, %v884, 0.0
    %948 = vadd.xlane.f32.xlu0 %v947
    %v949 = vpop.xlane.xlu0 %948
    %v950 = vsel %vm278, %v886, 0.0
    %951 = vadd.xlane.f32.xlu0 %v950
    %v952 = vpop.xlane.xlu0 %951
    %v953 = vsel %vm278, %v888, 0.0
    %954 = vadd.xlane.f32.xlu0 %v953
    %v955 = vpop.xlane.xlu0 %954
    %v956 = vsel %vm278, %v890, 0.0
    %957 = vadd.xlane.f32.xlu0 %v956
    %v958 = vpop.xlane.xlu0 %957
    %v959 = vsel %vm278, %v892, 0.0
    %960 = vadd.xlane.f32.xlu0 %v959
    %v961 = vpop.xlane.xlu0 %960
    %v962 = vsel %vm278, %v894, 0.0
    %963 = vadd.xlane.f32.xlu0 %v962
    %v964 = vpop.xlane.xlu0 %963
    %v965 = vsel %vm278, %v896, 0.0
    %966 = vadd.xlane.f32.xlu0 %v965
    %v967 = vpop.xlane.xlu0 %966
    %v968 = vsel %vm278, %v898, 0.0
    %969 = vadd.xlane.f32.xlu0 %v968
    %v970 = vpop.xlane.xlu0 %969
    %v971 = vsel %vm278, %v900, 0.0
    %972 = vadd.xlane.f32.xlu0 %v971
    %v973 = vpop.xlane.xlu0 %972
    %v974 = vsel %vm278, %v902, 0.0
    %975 = vadd.xlane.f32.xlu0 %v974
    %v976 = vpop.xlane.xlu0 %975
    %v977 = vsel %vm278, %v904, 0.0
    %978 = vadd.xlane.f32.xlu0 %v977
    %v979 = vpop.xlane.xlu0 %978
    %v980 = vsel %vm278, %v906, 0.0
    %981 = vadd.xlane.f32.xlu0 %v980
    %v982 = vpop.xlane.xlu0 %981
    %v983 = vsel %vm278, %v908, 0.0
    %984 = vadd.xlane.f32.xlu0 %v983
    %v985 = vpop.xlane.xlu0 %984
    %v986 = vsel %vm278, %v910, 0.0
    %987 = vadd.xlane.f32.xlu0 %v986
    %v988 = vpop.xlane.xlu0 %987
    %v989 = vsel %vm278, %v912, 0.0
    %990 = vadd.xlane.f32.xlu0 %v989
    %v991 = vpop.xlane.xlu0 %990
    %v992 = vsel %vm278, %v914, 0.0
    %993 = vadd.xlane.f32.xlu0 %v992
    %v994 = vpop.xlane.xlu0 %993
    %v995 = vsel %vm278, %v916, 0.0
    %996 = vadd.xlane.f32.xlu0 %v995
    %v997 = vpop.xlane.xlu0 %996
    %v998 = vsel %vm278, %v918, 0.0
    %999 = vadd.xlane.f32.xlu0 %v998
    %v1000 = vpop.xlane.xlu0 %999
    %v1001 = vsel %vm278, %v920, 0.0
    %1002 = vadd.xlane.f32.xlu0 %v1001
    %v1003 = vpop.xlane.xlu0 %1002
    %v1004 = vsel %vm278, %v922, 0.0
    %1005 = vadd.xlane.f32.xlu0 %v1004
    %v1006 = vpop.xlane.xlu0 %1005
    %v1007 = vsel %vm278, %v924, 0.0
    %1008 = vadd.xlane.f32.xlu0 %v1007
    %v1009 = vpop.xlane.xlu0 %1008
    %v1010 = vsel %vm278, %v926, 0.0
    %1011 = vadd.xlane.f32.xlu0 %v1010
    %v1012 = vpop.xlane.xlu0 %1011
    %v1013 = vsel %vm278, %v928, 0.0
    %1014 = vadd.xlane.f32.xlu0 %v1013
    %v1015 = vpop.xlane.xlu0 %1014
    %v1016 = vsel %vm278, %v930, 0.0
    %1017 = vadd.xlane.f32.xlu0 %v1016
    %v1018 = vpop.xlane.xlu0 %1017
    %v1019 = vsel %vm278, %v932, 0.0
    %1020 = vadd.xlane.f32.xlu0 %v1019
    %v1021 = vpop.xlane.xlu0 %1020
    %v1022 = vsel %vm278, %v934, 0.0
    %1023 = vadd.xlane.f32.xlu0 %v1022
    %v1024 = vpop.xlane.xlu0 %1023
    %v1025 = vsel %vm278, %v936, 0.0
    %1026 = vadd.xlane.f32.xlu0 %v1025
    %v1027 = vpop.xlane.xlu0 %1026
    %v1028 = vsel %vm278, %v938, 0.0
    %1029 = vadd.xlane.f32.xlu0 %v1028
    %v1030 = vpop.xlane.xlu0 %1029
    %v1031 = vsel %vm278, %v940, 0.0
    %1032 = vadd.xlane.f32.xlu0 %v1031
    %v1033 = vpop.xlane.xlu0 %1032
    %v1034 = vsel %vm278, %v942, 0.0
    %1035 = vadd.xlane.f32.xlu0 %v1034
    %v1036 = vpop.xlane.xlu0 %1035
    %v1037 = vsel %vm278, %v944, 0.0
    %1038 = vadd.xlane.f32.xlu0 %v1037
    %v1039 = vpop.xlane.xlu0 %1038
    %v1040 = vsel %vm278, %v946, 0.0
    %1041 = vadd.xlane.f32.xlu0 %v1040
    %v1042 = vpop.xlane.xlu0 %1041
    %1043 = vrot.lane.b32.xlu0 %v171, 64
    %v1044 = vpop.permute.xlu0 %1043
    %1045 = vrot.lane.b32.xlu0 %v174, 64
    %v1046 = vpop.permute.xlu0 %1045
    %1047 = vrot.lane.b32.xlu0 %v177, 64
    %v1048 = vpop.permute.xlu0 %1047
    %1049 = vrot.lane.b32.xlu0 %v180, 64
    %v1050 = vpop.permute.xlu0 %1049
    %v1056 = vsel %vm278, %v884, 0
    %v1059 = vsel %vm278, %v886, 0
    %v1062 = vsel %vm278, %v888, 0
    %v1065 = vsel %vm278, %v890, 0
    %1067 = vmatpush.msra.mxu0 0.0
    %1068 = vmatpush.msra.mxu0 0.0
    %1069 = vmatpush.msra.mxu0 0.0
    %1070 = vmatpush.msra.mxu0 0.0
    %1071 = vmatpush.msra.mxu0 0.0
    %1072 = vmatpush.msra.mxu0 0.0
    %1073 = vmatpush.msra.mxu0 0.0
    %1074 = vmatpush.msra.mxu0 0.0
    %1075 = vmatpush.msra.mxu0 0.0
    %1076 = vmatpush.msra.mxu0 0.0
    %1077 = vmatpush.msra.mxu0 0.0
    %1078 = vmatpush.msra.mxu0 0.0
    %1079 = vmatpush.msra.mxu0 %v1050
    %1080 = vmatpush.msra.mxu0 %v1048
    %1081 = vmatpush.msra.mxu0 %v1046
    %1082 = vmatpush.msra.mxu0 %v1044
    %1083 = vmatmul.f32.gmra.mxu0 %v1056
    %v1084 = vpop.f32.mrf.mxu0
    %v1085 = vadd.f32 0.0, %v1084
    %1086 = vmatmul.f32.gmra.mxu0 %v1059
    %v1087 = vpop.f32.mrf.mxu0
    %v1088 = vadd.f32 0.0, %v1087
    %1089 = vmatmul.f32.gmra.mxu0 %v1062
    %v1090 = vpop.f32.mrf.mxu0
    %v1091 = vadd.f32 0.0, %v1090
    %1092 = vmatmul.f32.gmra.mxu0 %v1065
    %v1093 = vpop.f32.mrf.mxu0
    %v1094 = vadd.f32 0.0, %v1093
    %1095 = vdwg.mxu0
    %1096 = vrot.lane.b32.xlu0 %v183, 64
    %v1097 = vpop.permute.xlu0 %1096
    %1098 = vrot.lane.b32.xlu0 %v186, 64
    %v1099 = vpop.permute.xlu0 %1098
    %1100 = vrot.lane.b32.xlu0 %v189, 64
    %v1101 = vpop.permute.xlu0 %1100
    %1102 = vrot.lane.b32.xlu0 %v192, 64
    %v1103 = vpop.permute.xlu0 %1102
    %v1109 = vsel %vm278, %v892, 0
    %v1112 = vsel %vm278, %v894, 0
    %v1115 = vsel %vm278, %v896, 0
    %v1118 = vsel %vm278, %v898, 0
    %1120 = vmatpush.msra.mxu0 0.0
    %1121 = vmatpush.msra.mxu0 0.0
    %1122 = vmatpush.msra.mxu0 0.0
    %1123 = vmatpush.msra.mxu0 0.0
    %1124 = vmatpush.msra.mxu0 0.0
    %1125 = vmatpush.msra.mxu0 0.0
    %1126 = vmatpush.msra.mxu0 0.0
    %1127 = vmatpush.msra.mxu0 0.0
    %1128 = vmatpush.msra.mxu0 0.0
    %1129 = vmatpush.msra.mxu0 0.0
    %1130 = vmatpush.msra.mxu0 0.0
    %1131 = vmatpush.msra.mxu0 0.0
    %1132 = vmatpush.msra.mxu0 %v1103
    %1133 = vmatpush.msra.mxu0 %v1101
    %1134 = vmatpush.msra.mxu0 %v1099
    %1135 = vmatpush.msra.mxu0 %v1097
    %1136 = vmatmul.f32.gmra.mxu0 %v1109
    %v1137 = vpop.f32.mrf.mxu0
    %v1138 = vadd.f32 0.0, %v1137
    %1139 = vmatmul.f32.gmra.mxu0 %v1112
    %v1140 = vpop.f32.mrf.mxu0
    %v1141 = vadd.f32 0.0, %v1140
    %1142 = vmatmul.f32.gmra.mxu0 %v1115
    %v1143 = vpop.f32.mrf.mxu0
    %v1144 = vadd.f32 0.0, %v1143
    %1145 = vmatmul.f32.gmra.mxu0 %v1118
    %v1146 = vpop.f32.mrf.mxu0
    %v1147 = vadd.f32 0.0, %v1146
    %1148 = vdwg.mxu0
    %1149 = vrot.lane.b32.xlu0 %v195, 64
    %v1150 = vpop.permute.xlu0 %1149
    %1151 = vrot.lane.b32.xlu0 %v198, 64
    %v1152 = vpop.permute.xlu0 %1151
    %1153 = vrot.lane.b32.xlu0 %v201, 64
    %v1154 = vpop.permute.xlu0 %1153
    %1155 = vrot.lane.b32.xlu0 %v204, 64
    %v1156 = vpop.permute.xlu0 %1155
    %v1162 = vsel %vm278, %v900, 0
    %v1165 = vsel %vm278, %v902, 0
    %v1168 = vsel %vm278, %v904, 0
    %v1171 = vsel %vm278, %v906, 0
    %1173 = vmatpush.msra.mxu0 0.0
    %1174 = vmatpush.msra.mxu0 0.0
    %1175 = vmatpush.msra.mxu0 0.0
    %1176 = vmatpush.msra.mxu0 0.0
    %1177 = vmatpush.msra.mxu0 0.0
    %1178 = vmatpush.msra.mxu0 0.0
    %1179 = vmatpush.msra.mxu0 0.0
    %1180 = vmatpush.msra.mxu0 0.0
    %1181 = vmatpush.msra.mxu0 0.0
    %1182 = vmatpush.msra.mxu0 0.0
    %1183 = vmatpush.msra.mxu0 0.0
    %1184 = vmatpush.msra.mxu0 0.0
    %1185 = vmatpush.msra.mxu0 %v1156
    %1186 = vmatpush.msra.mxu0 %v1154
    %1187 = vmatpush.msra.mxu0 %v1152
    %1188 = vmatpush.msra.mxu0 %v1150
    %1189 = vmatmul.f32.gmra.mxu0 %v1162
    %v1190 = vpop.f32.mrf.mxu0
    %v1191 = vadd.f32 0.0, %v1190
    %1192 = vmatmul.f32.gmra.mxu0 %v1165
    %v1193 = vpop.f32.mrf.mxu0
    %v1194 = vadd.f32 0.0, %v1193
    %1195 = vmatmul.f32.gmra.mxu0 %v1168
    %v1196 = vpop.f32.mrf.mxu0
    %v1197 = vadd.f32 0.0, %v1196
    %1198 = vmatmul.f32.gmra.mxu0 %v1171
    %v1199 = vpop.f32.mrf.mxu0
    %v1200 = vadd.f32 0.0, %v1199
    %1201 = vdwg.mxu0
    %1202 = vrot.lane.b32.xlu0 %v207, 64
    %v1203 = vpop.permute.xlu0 %1202
    %1204 = vrot.lane.b32.xlu0 %v210, 64
    %v1205 = vpop.permute.xlu0 %1204
    %1206 = vrot.lane.b32.xlu0 %v213, 64
    %v1207 = vpop.permute.xlu0 %1206
    %1208 = vrot.lane.b32.xlu0 %v216, 64
    %v1209 = vpop.permute.xlu0 %1208
    %v1215 = vsel %vm278, %v908, 0
    %v1218 = vsel %vm278, %v910, 0
    %v1221 = vsel %vm278, %v912, 0
    %v1224 = vsel %vm278, %v914, 0
    %1226 = vmatpush.msra.mxu0 0.0
    %1227 = vmatpush.msra.mxu0 0.0
    %1228 = vmatpush.msra.mxu0 0.0
    %1229 = vmatpush.msra.mxu0 0.0
    %1230 = vmatpush.msra.mxu0 0.0
    %1231 = vmatpush.msra.mxu0 0.0
    %1232 = vmatpush.msra.mxu0 0.0
    %1233 = vmatpush.msra.mxu0 0.0
    %1234 = vmatpush.msra.mxu0 0.0
    %1235 = vmatpush.msra.mxu0 0.0
    %1236 = vmatpush.msra.mxu0 0.0
    %1237 = vmatpush.msra.mxu0 0.0
    %1238 = vmatpush.msra.mxu0 %v1209
    %1239 = vmatpush.msra.mxu0 %v1207
    %1240 = vmatpush.msra.mxu0 %v1205
    %1241 = vmatpush.msra.mxu0 %v1203
    %1242 = vmatmul.f32.gmra.mxu0 %v1215
    %v1243 = vpop.f32.mrf.mxu0
    %v1244 = vadd.f32 0.0, %v1243
    %1245 = vmatmul.f32.gmra.mxu0 %v1218
    %v1246 = vpop.f32.mrf.mxu0
    %v1247 = vadd.f32 0.0, %v1246
    %1248 = vmatmul.f32.gmra.mxu0 %v1221
    %v1249 = vpop.f32.mrf.mxu0
    %v1250 = vadd.f32 0.0, %v1249
    %1251 = vmatmul.f32.gmra.mxu0 %v1224
    %v1252 = vpop.f32.mrf.mxu0
    %v1253 = vadd.f32 0.0, %v1252
    %1254 = vdwg.mxu0
    %1255 = vrot.lane.b32.xlu0 %v219, 64
    %v1256 = vpop.permute.xlu0 %1255
    %1257 = vrot.lane.b32.xlu0 %v222, 64
    %v1258 = vpop.permute.xlu0 %1257
    %1259 = vrot.lane.b32.xlu0 %v225, 64
    %v1260 = vpop.permute.xlu0 %1259
    %1261 = vrot.lane.b32.xlu0 %v228, 64
    %v1262 = vpop.permute.xlu0 %1261
    %v1268 = vsel %vm278, %v916, 0
    %v1271 = vsel %vm278, %v918, 0
    %v1274 = vsel %vm278, %v920, 0
    %v1277 = vsel %vm278, %v922, 0
    %1279 = vmatpush.msra.mxu0 0.0
    %1280 = vmatpush.msra.mxu0 0.0
    %1281 = vmatpush.msra.mxu0 0.0
    %1282 = vmatpush.msra.mxu0 0.0
    %1283 = vmatpush.msra.mxu0 0.0
    %1284 = vmatpush.msra.mxu0 0.0
    %1285 = vmatpush.msra.mxu0 0.0
    %1286 = vmatpush.msra.mxu0 0.0
    %1287 = vmatpush.msra.mxu0 0.0
    %1288 = vmatpush.msra.mxu0 0.0
    %1289 = vmatpush.msra.mxu0 0.0
    %1290 = vmatpush.msra.mxu0 0.0
    %1291 = vmatpush.msra.mxu0 %v1262
    %1292 = vmatpush.msra.mxu0 %v1260
    %1293 = vmatpush.msra.mxu0 %v1258
    %1294 = vmatpush.msra.mxu0 %v1256
    %1295 = vmatmul.f32.gmra.mxu0 %v1268
    %v1296 = vpop.f32.mrf.mxu0
    %v1297 = vadd.f32 0.0, %v1296
    %1298 = vmatmul.f32.gmra.mxu0 %v1271
    %v1299 = vpop.f32.mrf.mxu0
    %v1300 = vadd.f32 0.0, %v1299
    %1301 = vmatmul.f32.gmra.mxu0 %v1274
    %v1302 = vpop.f32.mrf.mxu0
    %v1303 = vadd.f32 0.0, %v1302
    %1304 = vmatmul.f32.gmra.mxu0 %v1277
    %v1305 = vpop.f32.mrf.mxu0
    %v1306 = vadd.f32 0.0, %v1305
    %1307 = vdwg.mxu0
    %1308 = vrot.lane.b32.xlu0 %v231, 64
    %v1309 = vpop.permute.xlu0 %1308
    %1310 = vrot.lane.b32.xlu0 %v234, 64
    %v1311 = vpop.permute.xlu0 %1310
    %1312 = vrot.lane.b32.xlu0 %v237, 64
    %v1313 = vpop.permute.xlu0 %1312
    %1314 = vrot.lane.b32.xlu0 %v240, 64
    %v1315 = vpop.permute.xlu0 %1314
    %v1321 = vsel %vm278, %v924, 0
    %v1324 = vsel %vm278, %v926, 0
    %v1327 = vsel %vm278, %v928, 0
    %v1330 = vsel %vm278, %v930, 0
    %1332 = vmatpush.msra.mxu0 0.0
    %1333 = vmatpush.msra.mxu0 0.0
    %1334 = vmatpush.msra.mxu0 0.0
    %1335 = vmatpush.msra.mxu0 0.0
    %1336 = vmatpush.msra.mxu0 0.0
    %1337 = vmatpush.msra.mxu0 0.0
    %1338 = vmatpush.msra.mxu0 0.0
    %1339 = vmatpush.msra.mxu0 0.0
    %1340 = vmatpush.msra.mxu0 0.0
    %1341 = vmatpush.msra.mxu0 0.0
    %1342 = vmatpush.msra.mxu0 0.0
    %1343 = vmatpush.msra.mxu0 0.0
    %1344 = vmatpush.msra.mxu0 %v1315
    %1345 = vmatpush.msra.mxu0 %v1313
    %1346 = vmatpush.msra.mxu0 %v1311
    %1347 = vmatpush.msra.mxu0 %v1309
    %1348 = vmatmul.f32.gmra.mxu0 %v1321
    %v1349 = vpop.f32.mrf.mxu0
    %v1350 = vadd.f32 0.0, %v1349
    %1351 = vmatmul.f32.gmra.mxu0 %v1324
    %v1352 = vpop.f32.mrf.mxu0
    %v1353 = vadd.f32 0.0, %v1352
    %1354 = vmatmul.f32.gmra.mxu0 %v1327
    %v1355 = vpop.f32.mrf.mxu0
    %v1356 = vadd.f32 0.0, %v1355
    %1357 = vmatmul.f32.gmra.mxu0 %v1330
    %v1358 = vpop.f32.mrf.mxu0
    %v1359 = vadd.f32 0.0, %v1358
    %1360 = vdwg.mxu0
    %1361 = vrot.lane.b32.xlu0 %v243, 64
    %v1362 = vpop.permute.xlu0 %1361
    %1363 = vrot.lane.b32.xlu0 %v246, 64
    %v1364 = vpop.permute.xlu0 %1363
    %1365 = vrot.lane.b32.xlu0 %v249, 64
    %v1366 = vpop.permute.xlu0 %1365
    %1367 = vrot.lane.b32.xlu0 %v252, 64
    %v1368 = vpop.permute.xlu0 %1367
    %v1374 = vsel %vm278, %v932, 0
    %v1377 = vsel %vm278, %v934, 0
    %v1380 = vsel %vm278, %v936, 0
    %v1383 = vsel %vm278, %v938, 0
    %1385 = vmatpush.msra.mxu0 0.0
    %1386 = vmatpush.msra.mxu0 0.0
    %1387 = vmatpush.msra.mxu0 0.0
    %1388 = vmatpush.msra.mxu0 0.0
    %1389 = vmatpush.msra.mxu0 0.0
    %1390 = vmatpush.msra.mxu0 0.0
    %1391 = vmatpush.msra.mxu0 0.0
    %1392 = vmatpush.msra.mxu0 0.0
    %1393 = vmatpush.msra.mxu0 0.0
    %1394 = vmatpush.msra.mxu0 0.0
    %1395 = vmatpush.msra.mxu0 0.0
    %1396 = vmatpush.msra.mxu0 0.0
    %1397 = vmatpush.msra.mxu0 %v1368
    %1398 = vmatpush.msra.mxu0 %v1366
    %1399 = vmatpush.msra.mxu0 %v1364
    %1400 = vmatpush.msra.mxu0 %v1362
    %1401 = vmatmul.f32.gmra.mxu0 %v1374
    %v1402 = vpop.f32.mrf.mxu0
    %v1403 = vadd.f32 0.0, %v1402
    %1404 = vmatmul.f32.gmra.mxu0 %v1377
    %v1405 = vpop.f32.mrf.mxu0
    %v1406 = vadd.f32 0.0, %v1405
    %1407 = vmatmul.f32.gmra.mxu0 %v1380
    %v1408 = vpop.f32.mrf.mxu0
    %v1409 = vadd.f32 0.0, %v1408
    %1410 = vmatmul.f32.gmra.mxu0 %v1383
    %v1411 = vpop.f32.mrf.mxu0
    %v1412 = vadd.f32 0.0, %v1411
    %1413 = vdwg.mxu0
    %1414 = vrot.lane.b32.xlu0 %v255, 64
    %v1415 = vpop.permute.xlu0 %1414
    %1416 = vrot.lane.b32.xlu0 %v258, 64
    %v1417 = vpop.permute.xlu0 %1416
    %1418 = vrot.lane.b32.xlu0 %v261, 64
    %v1419 = vpop.permute.xlu0 %1418
    %1420 = vrot.lane.b32.xlu0 %v264, 64
    %v1421 = vpop.permute.xlu0 %1420
    %v1427 = vsel %vm278, %v940, 0
    %v1430 = vsel %vm278, %v942, 0
    %v1433 = vsel %vm278, %v944, 0
    %v1436 = vsel %vm278, %v946, 0
    %1438 = vmatpush.msra.mxu0 0.0
    %1439 = vmatpush.msra.mxu0 0.0
    %1440 = vmatpush.msra.mxu0 0.0
    %1441 = vmatpush.msra.mxu0 0.0
    %1442 = vmatpush.msra.mxu0 0.0
    %1443 = vmatpush.msra.mxu0 0.0
    %1444 = vmatpush.msra.mxu0 0.0
    %1445 = vmatpush.msra.mxu0 0.0
    %1446 = vmatpush.msra.mxu0 0.0
    %1447 = vmatpush.msra.mxu0 0.0
    %1448 = vmatpush.msra.mxu0 0.0
    %1449 = vmatpush.msra.mxu0 0.0
    %1450 = vmatpush.msra.mxu0 %v1421
    %1451 = vmatpush.msra.mxu0 %v1419
    %1452 = vmatpush.msra.mxu0 %v1417
    %1453 = vmatpush.msra.mxu0 %v1415
    %1454 = vmatmul.f32.gmra.mxu0 %v1427
    %v1455 = vpop.f32.mrf.mxu0
    %v1456 = vadd.f32 0.0, %v1455
    %1457 = vmatmul.f32.gmra.mxu0 %v1430
    %v1458 = vpop.f32.mrf.mxu0
    %v1459 = vadd.f32 0.0, %v1458
    %1460 = vmatmul.f32.gmra.mxu0 %v1433
    %v1461 = vpop.f32.mrf.mxu0
    %v1462 = vadd.f32 0.0, %v1461
    %1463 = vmatmul.f32.gmra.mxu0 %v1436
    %v1464 = vpop.f32.mrf.mxu0
    %v1465 = vadd.f32 0.0, %v1464
    %1466 = vdwg.mxu0
    %v1467 = vsel %vm278, %v1085, 0.0
    %1468 = vadd.xlane.f32.xlu0 %v1467
    %v1469 = vpop.xlane.xlu0 %1468
    %v1470 = vsel %vm278, %v1088, 0.0
    %1471 = vadd.xlane.f32.xlu0 %v1470
    %v1472 = vpop.xlane.xlu0 %1471
    %v1473 = vsel %vm278, %v1091, 0.0
    %1474 = vadd.xlane.f32.xlu0 %v1473
    %v1475 = vpop.xlane.xlu0 %1474
    %v1476 = vsel %vm278, %v1094, 0.0
    %1477 = vadd.xlane.f32.xlu0 %v1476
    %v1478 = vpop.xlane.xlu0 %1477
    %v1479 = vsel %vm278, %v1138, 0.0
    %1480 = vadd.xlane.f32.xlu0 %v1479
    %v1481 = vpop.xlane.xlu0 %1480
    %v1482 = vsel %vm278, %v1141, 0.0
    %1483 = vadd.xlane.f32.xlu0 %v1482
    %v1484 = vpop.xlane.xlu0 %1483
    %v1485 = vsel %vm278, %v1144, 0.0
    %1486 = vadd.xlane.f32.xlu0 %v1485
    %v1487 = vpop.xlane.xlu0 %1486
    %v1488 = vsel %vm278, %v1147, 0.0
    %1489 = vadd.xlane.f32.xlu0 %v1488
    %v1490 = vpop.xlane.xlu0 %1489
    %v1491 = vsel %vm278, %v1191, 0.0
    %1492 = vadd.xlane.f32.xlu0 %v1491
    %v1493 = vpop.xlane.xlu0 %1492
    %v1494 = vsel %vm278, %v1194, 0.0
    %1495 = vadd.xlane.f32.xlu0 %v1494
    %v1496 = vpop.xlane.xlu0 %1495
    %v1497 = vsel %vm278, %v1197, 0.0
    %1498 = vadd.xlane.f32.xlu0 %v1497
    %v1499 = vpop.xlane.xlu0 %1498
    %v1500 = vsel %vm278, %v1200, 0.0
    %1501 = vadd.xlane.f32.xlu0 %v1500
    %v1502 = vpop.xlane.xlu0 %1501
    %v1503 = vsel %vm278, %v1244, 0.0
    %1504 = vadd.xlane.f32.xlu0 %v1503
    %v1505 = vpop.xlane.xlu0 %1504
    %v1506 = vsel %vm278, %v1247, 0.0
    %1507 = vadd.xlane.f32.xlu0 %v1506
    %v1508 = vpop.xlane.xlu0 %1507
    %v1509 = vsel %vm278, %v1250, 0.0
    %1510 = vadd.xlane.f32.xlu0 %v1509
    %v1511 = vpop.xlane.xlu0 %1510
    %v1512 = vsel %vm278, %v1253, 0.0
    %1513 = vadd.xlane.f32.xlu0 %v1512
    %v1514 = vpop.xlane.xlu0 %1513
    %v1515 = vsel %vm278, %v1297, 0.0
    %1516 = vadd.xlane.f32.xlu0 %v1515
    %v1517 = vpop.xlane.xlu0 %1516
    %v1518 = vsel %vm278, %v1300, 0.0
    %1519 = vadd.xlane.f32.xlu0 %v1518
    %v1520 = vpop.xlane.xlu0 %1519
    %v1521 = vsel %vm278, %v1303, 0.0
    %1522 = vadd.xlane.f32.xlu0 %v1521
    %v1523 = vpop.xlane.xlu0 %1522
    %v1524 = vsel %vm278, %v1306, 0.0
    %1525 = vadd.xlane.f32.xlu0 %v1524
    %v1526 = vpop.xlane.xlu0 %1525
    %v1527 = vsel %vm278, %v1350, 0.0
    %1528 = vadd.xlane.f32.xlu0 %v1527
    %v1529 = vpop.xlane.xlu0 %1528
    %v1530 = vsel %vm278, %v1353, 0.0
    %1531 = vadd.xlane.f32.xlu0 %v1530
    %v1532 = vpop.xlane.xlu0 %1531
    %v1533 = vsel %vm278, %v1356, 0.0
    %1534 = vadd.xlane.f32.xlu0 %v1533
    %v1535 = vpop.xlane.xlu0 %1534
    %v1536 = vsel %vm278, %v1359, 0.0
    %1537 = vadd.xlane.f32.xlu0 %v1536
    %v1538 = vpop.xlane.xlu0 %1537
    %v1539 = vsel %vm278, %v1403, 0.0
    %1540 = vadd.xlane.f32.xlu0 %v1539
    %v1541 = vpop.xlane.xlu0 %1540
    %v1542 = vsel %vm278, %v1406, 0.0
    %1543 = vadd.xlane.f32.xlu0 %v1542
    %v1544 = vpop.xlane.xlu0 %1543
    %v1545 = vsel %vm278, %v1409, 0.0
    %1546 = vadd.xlane.f32.xlu0 %v1545
    %v1547 = vpop.xlane.xlu0 %1546
    %v1548 = vsel %vm278, %v1412, 0.0
    %1549 = vadd.xlane.f32.xlu0 %v1548
    %v1550 = vpop.xlane.xlu0 %1549
    %v1551 = vsel %vm278, %v1456, 0.0
    %1552 = vadd.xlane.f32.xlu0 %v1551
    %v1553 = vpop.xlane.xlu0 %1552
    %v1554 = vsel %vm278, %v1459, 0.0
    %1555 = vadd.xlane.f32.xlu0 %v1554
    %v1556 = vpop.xlane.xlu0 %1555
    %v1557 = vsel %vm278, %v1462, 0.0
    %1558 = vadd.xlane.f32.xlu0 %v1557
    %v1559 = vpop.xlane.xlu0 %1558
    %v1560 = vsel %vm278, %v1465, 0.0
    %1561 = vadd.xlane.f32.xlu0 %v1560
    %v1562 = vpop.xlane.xlu0 %1561
    %v1563 = vmul.f32 %v949, 32.0
    %v1564 = vmul.f32 %v952, 32.0
    %v1565 = vmul.f32 %v955, 32.0
    %v1566 = vmul.f32 %v958, 32.0
    %v1567 = vmul.f32 %v961, 32.0
    %v1568 = vmul.f32 %v964, 32.0
    %v1569 = vmul.f32 %v967, 32.0
    %v1570 = vmul.f32 %v970, 32.0
    %v1571 = vmul.f32 %v973, 32.0
    %v1572 = vmul.f32 %v976, 32.0
    %v1573 = vmul.f32 %v979, 32.0
    %v1574 = vmul.f32 %v982, 32.0
    %v1575 = vmul.f32 %v985, 32.0
    %v1576 = vmul.f32 %v988, 32.0
    %v1577 = vmul.f32 %v991, 32.0
    %v1578 = vmul.f32 %v994, 32.0
    %v1579 = vmul.f32 %v997, 32.0
    %v1580 = vmul.f32 %v1000, 32.0
    %v1581 = vmul.f32 %v1003, 32.0
    %v1582 = vmul.f32 %v1006, 32.0
    %v1583 = vmul.f32 %v1009, 32.0
    %v1584 = vmul.f32 %v1012, 32.0
    %v1585 = vmul.f32 %v1015, 32.0
    %v1586 = vmul.f32 %v1018, 32.0
    %v1587 = vmul.f32 %v1021, 32.0
    %v1588 = vmul.f32 %v1024, 32.0
    %v1589 = vmul.f32 %v1027, 32.0
    %v1590 = vmul.f32 %v1030, 32.0
    %v1591 = vmul.f32 %v1033, 32.0
    %v1592 = vmul.f32 %v1036, 32.0
    %v1593 = vmul.f32 %v1039, 32.0
    %v1594 = vmul.f32 %v1042, 32.0
    %v1595 = vrcp.pop %v1563
    %v1596 = vmul.f32 %v1563, %v1595
    %v1597 = vsub.f32 1.0, %v1596
    %v1598 = vmul.f32 %v1595, %v1597
    %v1599 = vadd.f32 %v1595, %v1598
    %vm1600 = vweird.f32 %v1563
    %vm1601 = vweird.f32 %v1595
    %vm1602 = vmor %vm1600, %vm1601
    %v1603 = vsel %vm1602, %v1595, %v1599
    %v1604 = vand.u32 2147483647, %v1563
    %vm1605 = vcmp.eq.f32.partialorder %v1604, 8.507059e+37
    %v1606 = vand.u32 %v1563, 2147483648
    %v1607 = vor.u32 1.1754944e-38, %v1606
    %v1608 = vsel %vm1605, %v1607, %v1603
    %v1609 = vrcp.pop %v1564
    %v1610 = vmul.f32 %v1564, %v1609
    %v1611 = vsub.f32 1.0, %v1610
    %v1612 = vmul.f32 %v1609, %v1611
    %v1613 = vadd.f32 %v1609, %v1612
    %vm1614 = vweird.f32 %v1564
    %vm1615 = vweird.f32 %v1609
    %vm1616 = vmor %vm1614, %vm1615
    %v1617 = vsel %vm1616, %v1609, %v1613
    %v1618 = vand.u32 2147483647, %v1564
    %vm1619 = vcmp.eq.f32.partialorder %v1618, 8.507059e+37
    %v1620 = vand.u32 %v1564, 2147483648
    %v1621 = vor.u32 1.1754944e-38, %v1620
    %v1622 = vsel %vm1619, %v1621, %v1617
    %v1623 = vrcp.pop %v1565
    %v1624 = vmul.f32 %v1565, %v1623
    %v1625 = vsub.f32 1.0, %v1624
    %v1626 = vmul.f32 %v1623, %v1625
    %v1627 = vadd.f32 %v1623, %v1626
    %vm1628 = vweird.f32 %v1565
    %vm1629 = vweird.f32 %v1623
    %vm1630 = vmor %vm1628, %vm1629
    %v1631 = vsel %vm1630, %v1623, %v1627
    %v1632 = vand.u32 2147483647, %v1565
    %vm1633 = vcmp.eq.f32.partialorder %v1632, 8.507059e+37
    %v1634 = vand.u32 %v1565, 2147483648
    %v1635 = vor.u32 1.1754944e-38, %v1634
    %v1636 = vsel %vm1633, %v1635, %v1631
    %v1637 = vrcp.pop %v1566
    %v1638 = vmul.f32 %v1566, %v1637
    %v1639 = vsub.f32 1.0, %v1638
    %v1640 = vmul.f32 %v1637, %v1639
    %v1641 = vadd.f32 %v1637, %v1640
    %vm1642 = vweird.f32 %v1566
    %vm1643 = vweird.f32 %v1637
    %vm1644 = vmor %vm1642, %vm1643
    %v1645 = vsel %vm1644, %v1637, %v1641
    %v1646 = vand.u32 2147483647, %v1566
    %vm1647 = vcmp.eq.f32.partialorder %v1646, 8.507059e+37
    %v1648 = vand.u32 %v1566, 2147483648
    %v1649 = vor.u32 1.1754944e-38, %v1648
    %v1650 = vsel %vm1647, %v1649, %v1645
    %v1651 = vrcp.pop %v1567
    %v1652 = vmul.f32 %v1567, %v1651
    %v1653 = vsub.f32 1.0, %v1652
    %v1654 = vmul.f32 %v1651, %v1653
    %v1655 = vadd.f32 %v1651, %v1654
    %vm1656 = vweird.f32 %v1567
    %vm1657 = vweird.f32 %v1651
    %vm1658 = vmor %vm1656, %vm1657
    %v1659 = vsel %vm1658, %v1651, %v1655
    %v1660 = vand.u32 2147483647, %v1567
    %vm1661 = vcmp.eq.f32.partialorder %v1660, 8.507059e+37
    %v1662 = vand.u32 %v1567, 2147483648
    %v1663 = vor.u32 1.1754944e-38, %v1662
    %v1664 = vsel %vm1661, %v1663, %v1659
    %v1665 = vrcp.pop %v1568
    %v1666 = vmul.f32 %v1568, %v1665
    %v1667 = vsub.f32 1.0, %v1666
    %v1668 = vmul.f32 %v1665, %v1667
    %v1669 = vadd.f32 %v1665, %v1668
    %vm1670 = vweird.f32 %v1568
    %vm1671 = vweird.f32 %v1665
    %vm1672 = vmor %vm1670, %vm1671
    %v1673 = vsel %vm1672, %v1665, %v1669
    %v1674 = vand.u32 2147483647, %v1568
    %vm1675 = vcmp.eq.f32.partialorder %v1674, 8.507059e+37
    %v1676 = vand.u32 %v1568, 2147483648
    %v1677 = vor.u32 1.1754944e-38, %v1676
    %v1678 = vsel %vm1675, %v1677, %v1673
    %v1679 = vrcp.pop %v1569
    %v1680 = vmul.f32 %v1569, %v1679
    %v1681 = vsub.f32 1.0, %v1680
    %v1682 = vmul.f32 %v1679, %v1681
    %v1683 = vadd.f32 %v1679, %v1682
    %vm1684 = vweird.f32 %v1569
    %vm1685 = vweird.f32 %v1679
    %vm1686 = vmor %vm1684, %vm1685
    %v1687 = vsel %vm1686, %v1679, %v1683
    %v1688 = vand.u32 2147483647, %v1569
    %vm1689 = vcmp.eq.f32.partialorder %v1688, 8.507059e+37
    %v1690 = vand.u32 %v1569, 2147483648
    %v1691 = vor.u32 1.1754944e-38, %v1690
    %v1692 = vsel %vm1689, %v1691, %v1687
    %v1693 = vrcp.pop %v1570
    %v1694 = vmul.f32 %v1570, %v1693
    %v1695 = vsub.f32 1.0, %v1694
    %v1696 = vmul.f32 %v1693, %v1695
    %v1697 = vadd.f32 %v1693, %v1696
    %vm1698 = vweird.f32 %v1570
    %vm1699 = vweird.f32 %v1693
    %vm1700 = vmor %vm1698, %vm1699
    %v1701 = vsel %vm1700, %v1693, %v1697
    %v1702 = vand.u32 2147483647, %v1570
    %vm1703 = vcmp.eq.f32.partialorder %v1702, 8.507059e+37
    %v1704 = vand.u32 %v1570, 2147483648
    %v1705 = vor.u32 1.1754944e-38, %v1704
    %v1706 = vsel %vm1703, %v1705, %v1701
    %v1707 = vrcp.pop %v1571
    %v1708 = vmul.f32 %v1571, %v1707
    %v1709 = vsub.f32 1.0, %v1708
    %v1710 = vmul.f32 %v1707, %v1709
    %v1711 = vadd.f32 %v1707, %v1710
    %vm1712 = vweird.f32 %v1571
    %vm1713 = vweird.f32 %v1707
    %vm1714 = vmor %vm1712, %vm1713
    %v1715 = vsel %vm1714, %v1707, %v1711
    %v1716 = vand.u32 2147483647, %v1571
    %vm1717 = vcmp.eq.f32.partialorder %v1716, 8.507059e+37
    %v1718 = vand.u32 %v1571, 2147483648
    %v1719 = vor.u32 1.1754944e-38, %v1718
    %v1720 = vsel %vm1717, %v1719, %v1715
    %v1721 = vrcp.pop %v1572
    %v1722 = vmul.f32 %v1572, %v1721
    %v1723 = vsub.f32 1.0, %v1722
    %v1724 = vmul.f32 %v1721, %v1723
    %v1725 = vadd.f32 %v1721, %v1724
    %vm1726 = vweird.f32 %v1572
    %vm1727 = vweird.f32 %v1721
    %vm1728 = vmor %vm1726, %vm1727
    %v1729 = vsel %vm1728, %v1721, %v1725
    %v1730 = vand.u32 2147483647, %v1572
    %vm1731 = vcmp.eq.f32.partialorder %v1730, 8.507059e+37
    %v1732 = vand.u32 %v1572, 2147483648
    %v1733 = vor.u32 1.1754944e-38, %v1732
    %v1734 = vsel %vm1731, %v1733, %v1729
    %v1735 = vrcp.pop %v1573
    %v1736 = vmul.f32 %v1573, %v1735
    %v1737 = vsub.f32 1.0, %v1736
    %v1738 = vmul.f32 %v1735, %v1737
    %v1739 = vadd.f32 %v1735, %v1738
    %vm1740 = vweird.f32 %v1573
    %vm1741 = vweird.f32 %v1735
    %vm1742 = vmor %vm1740, %vm1741
    %v1743 = vsel %vm1742, %v1735, %v1739
    %v1744 = vand.u32 2147483647, %v1573
    %vm1745 = vcmp.eq.f32.partialorder %v1744, 8.507059e+37
    %v1746 = vand.u32 %v1573, 2147483648
    %v1747 = vor.u32 1.1754944e-38, %v1746
    %v1748 = vsel %vm1745, %v1747, %v1743
    %v1749 = vrcp.pop %v1574
    %v1750 = vmul.f32 %v1574, %v1749
    %v1751 = vsub.f32 1.0, %v1750
    %v1752 = vmul.f32 %v1749, %v1751
    %v1753 = vadd.f32 %v1749, %v1752
    %vm1754 = vweird.f32 %v1574
    %vm1755 = vweird.f32 %v1749
    %vm1756 = vmor %vm1754, %vm1755
    %v1757 = vsel %vm1756, %v1749, %v1753
    %v1758 = vand.u32 2147483647, %v1574
    %vm1759 = vcmp.eq.f32.partialorder %v1758, 8.507059e+37
    %v1760 = vand.u32 %v1574, 2147483648
    %v1761 = vor.u32 1.1754944e-38, %v1760
    %v1762 = vsel %vm1759, %v1761, %v1757
    %v1763 = vrcp.pop %v1575
    %v1764 = vmul.f32 %v1575, %v1763
    %v1765 = vsub.f32 1.0, %v1764
    %v1766 = vmul.f32 %v1763, %v1765
    %v1767 = vadd.f32 %v1763, %v1766
    %vm1768 = vweird.f32 %v1575
    %vm1769 = vweird.f32 %v1763
    %vm1770 = vmor %vm1768, %vm1769
    %v1771 = vsel %vm1770, %v1763, %v1767
    %v1772 = vand.u32 2147483647, %v1575
    %vm1773 = vcmp.eq.f32.partialorder %v1772, 8.507059e+37
    %v1774 = vand.u32 %v1575, 2147483648
    %v1775 = vor.u32 1.1754944e-38, %v1774
    %v1776 = vsel %vm1773, %v1775, %v1771
    %v1777 = vrcp.pop %v1576
    %v1778 = vmul.f32 %v1576, %v1777
    %v1779 = vsub.f32 1.0, %v1778
    %v1780 = vmul.f32 %v1777, %v1779
    %v1781 = vadd.f32 %v1777, %v1780
    %vm1782 = vweird.f32 %v1576
    %vm1783 = vweird.f32 %v1777
    %vm1784 = vmor %vm1782, %vm1783
    %v1785 = vsel %vm1784, %v1777, %v1781
    %v1786 = vand.u32 2147483647, %v1576
    %vm1787 = vcmp.eq.f32.partialorder %v1786, 8.507059e+37
    %v1788 = vand.u32 %v1576, 2147483648
    %v1789 = vor.u32 1.1754944e-38, %v1788
    %v1790 = vsel %vm1787, %v1789, %v1785
    %v1791 = vrcp.pop %v1577
    %v1792 = vmul.f32 %v1577, %v1791
    %v1793 = vsub.f32 1.0, %v1792
    %v1794 = vmul.f32 %v1791, %v1793
    %v1795 = vadd.f32 %v1791, %v1794
    %vm1796 = vweird.f32 %v1577
    %vm1797 = vweird.f32 %v1791
    %vm1798 = vmor %vm1796, %vm1797
    %v1799 = vsel %vm1798, %v1791, %v1795
    %v1800 = vand.u32 2147483647, %v1577
    %vm1801 = vcmp.eq.f32.partialorder %v1800, 8.507059e+37
    %v1802 = vand.u32 %v1577, 2147483648
    %v1803 = vor.u32 1.1754944e-38, %v1802
    %v1804 = vsel %vm1801, %v1803, %v1799
    %v1805 = vrcp.pop %v1578
    %v1806 = vmul.f32 %v1578, %v1805
    %v1807 = vsub.f32 1.0, %v1806
    %v1808 = vmul.f32 %v1805, %v1807
    %v1809 = vadd.f32 %v1805, %v1808
    %vm1810 = vweird.f32 %v1578
    %vm1811 = vweird.f32 %v1805
    %vm1812 = vmor %vm1810, %vm1811
    %v1813 = vsel %vm1812, %v1805, %v1809
    %v1814 = vand.u32 2147483647, %v1578
    %vm1815 = vcmp.eq.f32.partialorder %v1814, 8.507059e+37
    %v1816 = vand.u32 %v1578, 2147483648
    %v1817 = vor.u32 1.1754944e-38, %v1816
    %v1818 = vsel %vm1815, %v1817, %v1813
    %v1819 = vrcp.pop %v1579
    %v1820 = vmul.f32 %v1579, %v1819
    %v1821 = vsub.f32 1.0, %v1820
    %v1822 = vmul.f32 %v1819, %v1821
    %v1823 = vadd.f32 %v1819, %v1822
    %vm1824 = vweird.f32 %v1579
    %vm1825 = vweird.f32 %v1819
    %vm1826 = vmor %vm1824, %vm1825
    %v1827 = vsel %vm1826, %v1819, %v1823
    %v1828 = vand.u32 2147483647, %v1579
    %vm1829 = vcmp.eq.f32.partialorder %v1828, 8.507059e+37
    %v1830 = vand.u32 %v1579, 2147483648
    %v1831 = vor.u32 1.1754944e-38, %v1830
    %v1832 = vsel %vm1829, %v1831, %v1827
    %v1833 = vrcp.pop %v1580
    %v1834 = vmul.f32 %v1580, %v1833
    %v1835 = vsub.f32 1.0, %v1834
    %v1836 = vmul.f32 %v1833, %v1835
    %v1837 = vadd.f32 %v1833, %v1836
    %vm1838 = vweird.f32 %v1580
    %vm1839 = vweird.f32 %v1833
    %vm1840 = vmor %vm1838, %vm1839
    %v1841 = vsel %vm1840, %v1833, %v1837
    %v1842 = vand.u32 2147483647, %v1580
    %vm1843 = vcmp.eq.f32.partialorder %v1842, 8.507059e+37
    %v1844 = vand.u32 %v1580, 2147483648
    %v1845 = vor.u32 1.1754944e-38, %v1844
    %v1846 = vsel %vm1843, %v1845, %v1841
    %v1847 = vrcp.pop %v1581
    %v1848 = vmul.f32 %v1581, %v1847
    %v1849 = vsub.f32 1.0, %v1848
    %v1850 = vmul.f32 %v1847, %v1849
    %v1851 = vadd.f32 %v1847, %v1850
    %vm1852 = vweird.f32 %v1581
    %vm1853 = vweird.f32 %v1847
    %vm1854 = vmor %vm1852, %vm1853
    %v1855 = vsel %vm1854, %v1847, %v1851
    %v1856 = vand.u32 2147483647, %v1581
    %vm1857 = vcmp.eq.f32.partialorder %v1856, 8.507059e+37
    %v1858 = vand.u32 %v1581, 2147483648
    %v1859 = vor.u32 1.1754944e-38, %v1858
    %v1860 = vsel %vm1857, %v1859, %v1855
    %v1861 = vrcp.pop %v1582
    %v1862 = vmul.f32 %v1582, %v1861
    %v1863 = vsub.f32 1.0, %v1862
    %v1864 = vmul.f32 %v1861, %v1863
    %v1865 = vadd.f32 %v1861, %v1864
    %vm1866 = vweird.f32 %v1582
    %vm1867 = vweird.f32 %v1861
    %vm1868 = vmor %vm1866, %vm1867
    %v1869 = vsel %vm1868, %v1861, %v1865
    %v1870 = vand.u32 2147483647, %v1582
    %vm1871 = vcmp.eq.f32.partialorder %v1870, 8.507059e+37
    %v1872 = vand.u32 %v1582, 2147483648
    %v1873 = vor.u32 1.1754944e-38, %v1872
    %v1874 = vsel %vm1871, %v1873, %v1869
    %v1875 = vrcp.pop %v1583
    %v1876 = vmul.f32 %v1583, %v1875
    %v1877 = vsub.f32 1.0, %v1876
    %v1878 = vmul.f32 %v1875, %v1877
    %v1879 = vadd.f32 %v1875, %v1878
    %vm1880 = vweird.f32 %v1583
    %vm1881 = vweird.f32 %v1875
    %vm1882 = vmor %vm1880, %vm1881
    %v1883 = vsel %vm1882, %v1875, %v1879
    %v1884 = vand.u32 2147483647, %v1583
    %vm1885 = vcmp.eq.f32.partialorder %v1884, 8.507059e+37
    %v1886 = vand.u32 %v1583, 2147483648
    %v1887 = vor.u32 1.1754944e-38, %v1886
    %v1888 = vsel %vm1885, %v1887, %v1883
    %v1889 = vrcp.pop %v1584
    %v1890 = vmul.f32 %v1584, %v1889
    %v1891 = vsub.f32 1.0, %v1890
    %v1892 = vmul.f32 %v1889, %v1891
    %v1893 = vadd.f32 %v1889, %v1892
    %vm1894 = vweird.f32 %v1584
    %vm1895 = vweird.f32 %v1889
    %vm1896 = vmor %vm1894, %vm1895
    %v1897 = vsel %vm1896, %v1889, %v1893
    %v1898 = vand.u32 2147483647, %v1584
    %vm1899 = vcmp.eq.f32.partialorder %v1898, 8.507059e+37
    %v1900 = vand.u32 %v1584, 2147483648
    %v1901 = vor.u32 1.1754944e-38, %v1900
    %v1902 = vsel %vm1899, %v1901, %v1897
    %v1903 = vrcp.pop %v1585
    %v1904 = vmul.f32 %v1585, %v1903
    %v1905 = vsub.f32 1.0, %v1904
    %v1906 = vmul.f32 %v1903, %v1905
    %v1907 = vadd.f32 %v1903, %v1906
    %vm1908 = vweird.f32 %v1585
    %vm1909 = vweird.f32 %v1903
    %vm1910 = vmor %vm1908, %vm1909
    %v1911 = vsel %vm1910, %v1903, %v1907
    %v1912 = vand.u32 2147483647, %v1585
    %vm1913 = vcmp.eq.f32.partialorder %v1912, 8.507059e+37
    %v1914 = vand.u32 %v1585, 2147483648
    %v1915 = vor.u32 1.1754944e-38, %v1914
    %v1916 = vsel %vm1913, %v1915, %v1911
    %v1917 = vrcp.pop %v1586
    %v1918 = vmul.f32 %v1586, %v1917
    %v1919 = vsub.f32 1.0, %v1918
    %v1920 = vmul.f32 %v1917, %v1919
    %v1921 = vadd.f32 %v1917, %v1920
    %vm1922 = vweird.f32 %v1586
    %vm1923 = vweird.f32 %v1917
    %vm1924 = vmor %vm1922, %vm1923
    %v1925 = vsel %vm1924, %v1917, %v1921
    %v1926 = vand.u32 2147483647, %v1586
    %vm1927 = vcmp.eq.f32.partialorder %v1926, 8.507059e+37
    %v1928 = vand.u32 %v1586, 2147483648
    %v1929 = vor.u32 1.1754944e-38, %v1928
    %v1930 = vsel %vm1927, %v1929, %v1925
    %v1931 = vrcp.pop %v1587
    %v1932 = vmul.f32 %v1587, %v1931
    %v1933 = vsub.f32 1.0, %v1932
    %v1934 = vmul.f32 %v1931, %v1933
    %v1935 = vadd.f32 %v1931, %v1934
    %vm1936 = vweird.f32 %v1587
    %vm1937 = vweird.f32 %v1931
    %vm1938 = vmor %vm1936, %vm1937
    %v1939 = vsel %vm1938, %v1931, %v1935
    %v1940 = vand.u32 2147483647, %v1587
    %vm1941 = vcmp.eq.f32.partialorder %v1940, 8.507059e+37
    %v1942 = vand.u32 %v1587, 2147483648
    %v1943 = vor.u32 1.1754944e-38, %v1942
    %v1944 = vsel %vm1941, %v1943, %v1939
    %v1945 = vrcp.pop %v1588
    %v1946 = vmul.f32 %v1588, %v1945
    %v1947 = vsub.f32 1.0, %v1946
    %v1948 = vmul.f32 %v1945, %v1947
    %v1949 = vadd.f32 %v1945, %v1948
    %vm1950 = vweird.f32 %v1588
    %vm1951 = vweird.f32 %v1945
    %vm1952 = vmor %vm1950, %vm1951
    %v1953 = vsel %vm1952, %v1945, %v1949
    %v1954 = vand.u32 2147483647, %v1588
    %vm1955 = vcmp.eq.f32.partialorder %v1954, 8.507059e+37
    %v1956 = vand.u32 %v1588, 2147483648
    %v1957 = vor.u32 1.1754944e-38, %v1956
    %v1958 = vsel %vm1955, %v1957, %v1953
    %v1959 = vrcp.pop %v1589
    %v1960 = vmul.f32 %v1589, %v1959
    %v1961 = vsub.f32 1.0, %v1960
    %v1962 = vmul.f32 %v1959, %v1961
    %v1963 = vadd.f32 %v1959, %v1962
    %vm1964 = vweird.f32 %v1589
    %vm1965 = vweird.f32 %v1959
    %vm1966 = vmor %vm1964, %vm1965
    %v1967 = vsel %vm1966, %v1959, %v1963
    %v1968 = vand.u32 2147483647, %v1589
    %vm1969 = vcmp.eq.f32.partialorder %v1968, 8.507059e+37
    %v1970 = vand.u32 %v1589, 2147483648
    %v1971 = vor.u32 1.1754944e-38, %v1970
    %v1972 = vsel %vm1969, %v1971, %v1967
    %v1973 = vrcp.pop %v1590
    %v1974 = vmul.f32 %v1590, %v1973
    %v1975 = vsub.f32 1.0, %v1974
    %v1976 = vmul.f32 %v1973, %v1975
    %v1977 = vadd.f32 %v1973, %v1976
    %vm1978 = vweird.f32 %v1590
    %vm1979 = vweird.f32 %v1973
    %vm1980 = vmor %vm1978, %vm1979
    %v1981 = vsel %vm1980, %v1973, %v1977
    %v1982 = vand.u32 2147483647, %v1590
    %vm1983 = vcmp.eq.f32.partialorder %v1982, 8.507059e+37
    %v1984 = vand.u32 %v1590, 2147483648
    %v1985 = vor.u32 1.1754944e-38, %v1984
    %v1986 = vsel %vm1983, %v1985, %v1981
    %v1987 = vrcp.pop %v1591
    %v1988 = vmul.f32 %v1591, %v1987
    %v1989 = vsub.f32 1.0, %v1988
    %v1990 = vmul.f32 %v1987, %v1989
    %v1991 = vadd.f32 %v1987, %v1990
    %vm1992 = vweird.f32 %v1591
    %vm1993 = vweird.f32 %v1987
    %vm1994 = vmor %vm1992, %vm1993
    %v1995 = vsel %vm1994, %v1987, %v1991
    %v1996 = vand.u32 2147483647, %v1591
    %vm1997 = vcmp.eq.f32.partialorder %v1996, 8.507059e+37
    %v1998 = vand.u32 %v1591, 2147483648
    %v1999 = vor.u32 1.1754944e-38, %v1998
    %v2000 = vsel %vm1997, %v1999, %v1995
    %v2001 = vrcp.pop %v1592
    %v2002 = vmul.f32 %v1592, %v2001
    %v2003 = vsub.f32 1.0, %v2002
    %v2004 = vmul.f32 %v2001, %v2003
    %v2005 = vadd.f32 %v2001, %v2004
    %vm2006 = vweird.f32 %v1592
    %vm2007 = vweird.f32 %v2001
    %vm2008 = vmor %vm2006, %vm2007
    %v2009 = vsel %vm2008, %v2001, %v2005
    %v2010 = vand.u32 2147483647, %v1592
    %vm2011 = vcmp.eq.f32.partialorder %v2010, 8.507059e+37
    %v2012 = vand.u32 %v1592, 2147483648
    %v2013 = vor.u32 1.1754944e-38, %v2012
    %v2014 = vsel %vm2011, %v2013, %v2009
    %v2015 = vrcp.pop %v1593
    %v2016 = vmul.f32 %v1593, %v2015
    %v2017 = vsub.f32 1.0, %v2016
    %v2018 = vmul.f32 %v2015, %v2017
    %v2019 = vadd.f32 %v2015, %v2018
    %vm2020 = vweird.f32 %v1593
    %vm2021 = vweird.f32 %v2015
    %vm2022 = vmor %vm2020, %vm2021
    %v2023 = vsel %vm2022, %v2015, %v2019
    %v2024 = vand.u32 2147483647, %v1593
    %vm2025 = vcmp.eq.f32.partialorder %v2024, 8.507059e+37
    %v2026 = vand.u32 %v1593, 2147483648
    %v2027 = vor.u32 1.1754944e-38, %v2026
    %v2028 = vsel %vm2025, %v2027, %v2023
    %v2029 = vrcp.pop %v1594
    %v2030 = vmul.f32 %v1594, %v2029
    %v2031 = vsub.f32 1.0, %v2030
    %v2032 = vmul.f32 %v2029, %v2031
    %v2033 = vadd.f32 %v2029, %v2032
    %vm2034 = vweird.f32 %v1594
    %vm2035 = vweird.f32 %v2029
    %vm2036 = vmor %vm2034, %vm2035
    %v2037 = vsel %vm2036, %v2029, %v2033
    %v2038 = vand.u32 2147483647, %v1594
    %vm2039 = vcmp.eq.f32.partialorder %v2038, 8.507059e+37
    %v2040 = vand.u32 %v1594, 2147483648
    %v2041 = vor.u32 1.1754944e-38, %v2040
    %v2042 = vsel %vm2039, %v2041, %v2037
    %v2043 = vmul.f32 %v1469, %v1608
    %v2044 = vmul.f32 %v1472, %v1622
    %v2045 = vmul.f32 %v1475, %v1636
    %v2046 = vmul.f32 %v1478, %v1650
    %v2047 = vmul.f32 %v1481, %v1664
    %v2048 = vmul.f32 %v1484, %v1678
    %v2049 = vmul.f32 %v1487, %v1692
    %v2050 = vmul.f32 %v1490, %v1706
    %v2051 = vmul.f32 %v1493, %v1720
    %v2052 = vmul.f32 %v1496, %v1734
    %v2053 = vmul.f32 %v1499, %v1748
    %v2054 = vmul.f32 %v1502, %v1762
    %v2055 = vmul.f32 %v1505, %v1776
    %v2056 = vmul.f32 %v1508, %v1790
    %v2057 = vmul.f32 %v1511, %v1804
    %v2058 = vmul.f32 %v1514, %v1818
    %v2059 = vmul.f32 %v1517, %v1832
    %v2060 = vmul.f32 %v1520, %v1846
    %v2061 = vmul.f32 %v1523, %v1860
    %v2062 = vmul.f32 %v1526, %v1874
    %v2063 = vmul.f32 %v1529, %v1888
    %v2064 = vmul.f32 %v1532, %v1902
    %v2065 = vmul.f32 %v1535, %v1916
    %v2066 = vmul.f32 %v1538, %v1930
    %v2067 = vmul.f32 %v1541, %v1944
    %v2068 = vmul.f32 %v1544, %v1958
    %v2069 = vmul.f32 %v1547, %v1972
    %v2070 = vmul.f32 %v1550, %v1986
    %v2071 = vmul.f32 %v1553, %v2000
    %v2072 = vmul.f32 %v1556, %v2014
    %v2073 = vmul.f32 %v1559, %v2028
    %v2074 = vmul.f32 %v1562, %v2042
    %v2075 = vsel %vm52, %v15, 0.0
    %2076 = vadd.xlane.f32.xlu0 %v2075
    %v2077 = vpop.xlane.xlu0 %2076
    %v2078 = vsel %vm52, %v16, 0.0
    %2079 = vadd.xlane.f32.xlu0 %v2078
    %v2080 = vpop.xlane.xlu0 %2079
    %v2081 = vsel %vm52, %v17, 0.0
    %2082 = vadd.xlane.f32.xlu0 %v2081
    %v2083 = vpop.xlane.xlu0 %2082
    %v2084 = vsel %vm52, %v18, 0.0
    %2085 = vadd.xlane.f32.xlu0 %v2084
    %v2086 = vpop.xlane.xlu0 %2085
    %v2087 = vsel %vm52, %v19, 0.0
    %2088 = vadd.xlane.f32.xlu0 %v2087
    %v2089 = vpop.xlane.xlu0 %2088
    %v2090 = vsel %vm52, %v20, 0.0
    %2091 = vadd.xlane.f32.xlu0 %v2090
    %v2092 = vpop.xlane.xlu0 %2091
    %v2093 = vsel %vm52, %v21, 0.0
    %2094 = vadd.xlane.f32.xlu0 %v2093
    %v2095 = vpop.xlane.xlu0 %2094
    %v2096 = vsel %vm52, %v22, 0.0
    %2097 = vadd.xlane.f32.xlu0 %v2096
    %v2098 = vpop.xlane.xlu0 %2097
    %v2099 = vsel %vm52, %v23, 0.0
    %2100 = vadd.xlane.f32.xlu0 %v2099
    %v2101 = vpop.xlane.xlu0 %2100
    %v2102 = vsel %vm52, %v24, 0.0
    %2103 = vadd.xlane.f32.xlu0 %v2102
    %v2104 = vpop.xlane.xlu0 %2103
    %v2105 = vsel %vm52, %v25, 0.0
    %2106 = vadd.xlane.f32.xlu0 %v2105
    %v2107 = vpop.xlane.xlu0 %2106
    %v2108 = vsel %vm52, %v26, 0.0
    %2109 = vadd.xlane.f32.xlu0 %v2108
    %v2110 = vpop.xlane.xlu0 %2109
    %v2111 = vsel %vm52, %v27, 0.0
    %2112 = vadd.xlane.f32.xlu0 %v2111
    %v2113 = vpop.xlane.xlu0 %2112
    %v2114 = vsel %vm52, %v28, 0.0
    %2115 = vadd.xlane.f32.xlu0 %v2114
    %v2116 = vpop.xlane.xlu0 %2115
    %v2117 = vsel %vm52, %v29, 0.0
    %2118 = vadd.xlane.f32.xlu0 %v2117
    %v2119 = vpop.xlane.xlu0 %2118
    %v2120 = vsel %vm52, %v30, 0.0
    %2121 = vadd.xlane.f32.xlu0 %v2120
    %v2122 = vpop.xlane.xlu0 %2121
    %v2123 = vsel %vm52, %v31, 0.0
    %2124 = vadd.xlane.f32.xlu0 %v2123
    %v2125 = vpop.xlane.xlu0 %2124
    %v2126 = vsel %vm52, %v32, 0.0
    %2127 = vadd.xlane.f32.xlu0 %v2126
    %v2128 = vpop.xlane.xlu0 %2127
    %v2129 = vsel %vm52, %v33, 0.0
    %2130 = vadd.xlane.f32.xlu0 %v2129
    %v2131 = vpop.xlane.xlu0 %2130
    %v2132 = vsel %vm52, %v34, 0.0
    %2133 = vadd.xlane.f32.xlu0 %v2132
    %v2134 = vpop.xlane.xlu0 %2133
    %v2135 = vsel %vm52, %v35, 0.0
    %2136 = vadd.xlane.f32.xlu0 %v2135
    %v2137 = vpop.xlane.xlu0 %2136
    %v2138 = vsel %vm52, %v36, 0.0
    %2139 = vadd.xlane.f32.xlu0 %v2138
    %v2140 = vpop.xlane.xlu0 %2139
    %v2141 = vsel %vm52, %v37, 0.0
    %2142 = vadd.xlane.f32.xlu0 %v2141
    %v2143 = vpop.xlane.xlu0 %2142
    %v2144 = vsel %vm52, %v38, 0.0
    %2145 = vadd.xlane.f32.xlu0 %v2144
    %v2146 = vpop.xlane.xlu0 %2145
    %v2147 = vsel %vm52, %v39, 0.0
    %2148 = vadd.xlane.f32.xlu0 %v2147
    %v2149 = vpop.xlane.xlu0 %2148
    %v2150 = vsel %vm52, %v40, 0.0
    %2151 = vadd.xlane.f32.xlu0 %v2150
    %v2152 = vpop.xlane.xlu0 %2151
    %v2153 = vsel %vm52, %v41, 0.0
    %2154 = vadd.xlane.f32.xlu0 %v2153
    %v2155 = vpop.xlane.xlu0 %2154
    %v2156 = vsel %vm52, %v42, 0.0
    %2157 = vadd.xlane.f32.xlu0 %v2156
    %v2158 = vpop.xlane.xlu0 %2157
    %v2159 = vsel %vm52, %v43, 0.0
    %2160 = vadd.xlane.f32.xlu0 %v2159
    %v2161 = vpop.xlane.xlu0 %2160
    %v2162 = vsel %vm52, %v44, 0.0
    %2163 = vadd.xlane.f32.xlu0 %v2162
    %v2164 = vpop.xlane.xlu0 %2163
    %v2165 = vsel %vm52, %v45, 0.0
    %2166 = vadd.xlane.f32.xlu0 %v2165
    %v2167 = vpop.xlane.xlu0 %2166
    %v2168 = vsel %vm52, %v46, 0.0
    %2169 = vadd.xlane.f32.xlu0 %v2168
    %v2170 = vpop.xlane.xlu0 %2169
    %v2171 = vrcp.pop 4.0
    %v2172 = vmul.f32 4.0, %v2171
    %v2173 = vsub.f32 1.0, %v2172
    %v2174 = vmul.f32 %v2171, %v2173
    %v2175 = vadd.f32 %v2171, %v2174
    %vm2176 = vweird.f32 %v2171
    %v2177 = vsel %vm2176, %v2171, %v2175
    %v2178 = vmul.f32 %v2077, %v2177
    %v2179 = vmul.f32 %v2080, %v2177
    %v2180 = vmul.f32 %v2083, %v2177
    %v2181 = vmul.f32 %v2086, %v2177
    %v2182 = vmul.f32 %v2089, %v2177
    %v2183 = vmul.f32 %v2092, %v2177
    %v2184 = vmul.f32 %v2095, %v2177
    %v2185 = vmul.f32 %v2098, %v2177
    %v2186 = vmul.f32 %v2101, %v2177
    %v2187 = vmul.f32 %v2104, %v2177
    %v2188 = vmul.f32 %v2107, %v2177
    %v2189 = vmul.f32 %v2110, %v2177
    %v2190 = vmul.f32 %v2113, %v2177
    %v2191 = vmul.f32 %v2116, %v2177
    %v2192 = vmul.f32 %v2119, %v2177
    %v2193 = vmul.f32 %v2122, %v2177
    %v2194 = vmul.f32 %v2125, %v2177
    %v2195 = vmul.f32 %v2128, %v2177
    %v2196 = vmul.f32 %v2131, %v2177
    %v2197 = vmul.f32 %v2134, %v2177
    %v2198 = vmul.f32 %v2137, %v2177
    %v2199 = vmul.f32 %v2140, %v2177
    %v2200 = vmul.f32 %v2143, %v2177
    %v2201 = vmul.f32 %v2146, %v2177
    %v2202 = vmul.f32 %v2149, %v2177
    %v2203 = vmul.f32 %v2152, %v2177
    %v2204 = vmul.f32 %v2155, %v2177
    %v2205 = vmul.f32 %v2158, %v2177
    %v2206 = vmul.f32 %v2161, %v2177
    %v2207 = vmul.f32 %v2164, %v2177
    %v2208 = vmul.f32 %v2167, %v2177
    %v2209 = vmul.f32 %v2170, %v2177
    %v2210 = vadd.f32 %v2043, %v2178
    %v2211 = vadd.f32 %v2044, %v2179
    %v2212 = vadd.f32 %v2045, %v2180
    %v2213 = vadd.f32 %v2046, %v2181
    %v2214 = vadd.f32 %v2047, %v2182
    %v2215 = vadd.f32 %v2048, %v2183
    %v2216 = vadd.f32 %v2049, %v2184
    %v2217 = vadd.f32 %v2050, %v2185
    %v2218 = vadd.f32 %v2051, %v2186
    %v2219 = vadd.f32 %v2052, %v2187
    %v2220 = vadd.f32 %v2053, %v2188
    %v2221 = vadd.f32 %v2054, %v2189
    %v2222 = vadd.f32 %v2055, %v2190
    %v2223 = vadd.f32 %v2056, %v2191
    %v2224 = vadd.f32 %v2057, %v2192
    %v2225 = vadd.f32 %v2058, %v2193
    %v2226 = vadd.f32 %v2059, %v2194
    %v2227 = vadd.f32 %v2060, %v2195
    %v2228 = vadd.f32 %v2061, %v2196
    %v2229 = vadd.f32 %v2062, %v2197
    %v2230 = vadd.f32 %v2063, %v2198
    %v2231 = vadd.f32 %v2064, %v2199
    %v2232 = vadd.f32 %v2065, %v2200
    %v2233 = vadd.f32 %v2066, %v2201
    %v2234 = vadd.f32 %v2067, %v2202
    %v2235 = vadd.f32 %v2068, %v2203
    %v2236 = vadd.f32 %v2069, %v2204
    %v2237 = vadd.f32 %v2070, %v2205
    %v2238 = vadd.f32 %v2071, %v2206
    %v2239 = vadd.f32 %v2072, %v2207
    %v2240 = vadd.f32 %v2073, %v2208
    %v2241 = vadd.f32 %v2074, %v2209
    %v2274 = vlaneseq
    %v2275 = vand.u32 %v2274, 127
    %v2276 = vperm.slane %v2210, %v2275
    %v2277 = vadd.s32 %v2275, 4294967288
    %v2278 = vperm.slane %v2211, %v2277
    %vm2279 = vcmask 130112
    %v2280 = vsel %vm2279, %v2278, %v2276
    %v2281 = vadd.s32 %v2275, 4294967280
    %v2282 = vperm.slane %v2212, %v2281
    %vm2283 = vcmask 195712
    %v2284 = vsel %vm2283, %v2282, %v2280
    %v2285 = vadd.s32 %v2275, 4294967272
    %v2286 = vperm.slane %v2213, %v2285
    %vm2287 = vcmask 261312
    %v2288 = vsel %vm2287, %v2286, %v2284
    %v2289 = vperm.slane %v2214, %v2275
    %v2290 = vperm.slane %v2215, %v2277
    %v2291 = vsel %vm2279, %v2290, %v2289
    %v2292 = vperm.slane %v2216, %v2281
    %v2293 = vsel %vm2283, %v2292, %v2291
    %v2294 = vperm.slane %v2217, %v2285
    %v2295 = vsel %vm2287, %v2294, %v2293
    %v2296 = vperm.slane %v2218, %v2275
    %v2297 = vperm.slane %v2219, %v2277
    %v2298 = vsel %vm2279, %v2297, %v2296
    %v2299 = vperm.slane %v2220, %v2281
    %v2300 = vsel %vm2283, %v2299, %v2298
    %v2301 = vperm.slane %v2221, %v2285
    %v2302 = vsel %vm2287, %v2301, %v2300
    %v2303 = vperm.slane %v2222, %v2275
    %v2304 = vperm.slane %v2223, %v2277
    %v2305 = vsel %vm2279, %v2304, %v2303
    %v2306 = vperm.slane %v2224, %v2281
    %v2307 = vsel %vm2283, %v2306, %v2305
    %v2308 = vperm.slane %v2225, %v2285
    %v2309 = vsel %vm2287, %v2308, %v2307
    %v2310 = vperm.slane %v2226, %v2275
    %v2311 = vperm.slane %v2227, %v2277
    %v2312 = vsel %vm2279, %v2311, %v2310
    %v2313 = vperm.slane %v2228, %v2281
    %v2314 = vsel %vm2283, %v2313, %v2312
    %v2315 = vperm.slane %v2229, %v2285
    %v2316 = vsel %vm2287, %v2315, %v2314
    %v2317 = vperm.slane %v2230, %v2275
    %v2318 = vperm.slane %v2231, %v2277
    %v2319 = vsel %vm2279, %v2318, %v2317
    %v2320 = vperm.slane %v2232, %v2281
    %v2321 = vsel %vm2283, %v2320, %v2319
    %v2322 = vperm.slane %v2233, %v2285
    %v2323 = vsel %vm2287, %v2322, %v2321
    %v2324 = vperm.slane %v2234, %v2275
    %v2325 = vperm.slane %v2235, %v2277
    %v2326 = vsel %vm2279, %v2325, %v2324
    %v2327 = vperm.slane %v2236, %v2281
    %v2328 = vsel %vm2283, %v2327, %v2326
    %v2329 = vperm.slane %v2237, %v2285
    %v2330 = vsel %vm2287, %v2329, %v2328
    %v2331 = vperm.slane %v2238, %v2275
    %v2332 = vperm.slane %v2239, %v2277
    %v2333 = vsel %vm2279, %v2332, %v2331
    %v2334 = vperm.slane %v2240, %v2281
    %v2335 = vsel %vm2283, %v2334, %v2333
    %v2336 = vperm.slane %v2241, %v2285
    %v2337 = vsel %vm2287, %v2336, %v2335
    %vm2338 = vcmask 1041409
    %v2339 = vsel %vm2338, %v2295, %v2288
    %vm2340 = vcmask 1042434
    %v2341 = vsel %vm2340, %v2302, %v2339
    %vm2342 = vcmask 1043459
    %v2343 = vsel %vm2342, %v2309, %v2341
    %vm2344 = vcmask 1044484
    %v2345 = vsel %vm2344, %v2316, %v2343
    %vm2346 = vcmask 1045509
    %v2347 = vsel %vm2346, %v2323, %v2345
    %vm2348 = vcmask 1046534
    %v2349 = vsel %vm2348, %v2330, %v2347
    %vm2350 = vcmask 1047559
    %v2351 = vsel %vm2350, %v2337, %v2349
    %2353 = vst.msk [vmem:[#allocation2] sm:$0xff] %vm278, %v2351
    // Predicated region
    $region14: #{tpu_custom_call.1} parent=1 // pred_check
      _
    $region15: #{tpu_custom_call.1} parent=1 // pred_check_branch
      %2355 = sbr.rel (0) target = $region17
    $region16: #{tpu_custom_call.1} parent=1 // pred_region
      %2357 = vsyncadd [#allocation3], 0
      %s2359 = sshll.u32 [#allocation2], 4
      %s2360 = int_to_ptr.vmem [resolvable:$true] %s2359
      %s2361 = sshll.u32 %s3, 4
      %s2362 = int_to_ptr.hbm [resolvable:$true] %s2361
      %2364 = dma.vmem_to_hbm [thread:$0]  %s2360, 128, %s2362, [#allocation3]
    $region17: #{tpu_custom_call.1} parent=1 // pred_fallthru
      _
    // Predicated region
    $region18: #{tpu_custom_call.1} parent=1 // pred_check
      _
    $region19: #{tpu_custom_call.1} parent=1 // pred_check_branch
      %2366 = sbr.rel (0) target = $region21
    $region20: #{tpu_custom_call.1} parent=1 // pred_region
      %2368 = dma.done [#allocation3], 128
    $region21: #{tpu_custom_call.1} parent=1 // pred_fallthru
      _
    %2369 = vsyncpa [#allocation3], 1

</llo_original>
